<compile_context>
chip_gen: v7x
topology: tpu7x:2x2x1
jax: 0.10.0
libtpu: 0.0.40
codegen_flags: <defaults>
</compile_context>

<pallas_src>
import functools

import jax
import jax.numpy as jnp
from jax.experimental import pallas as pl
from jax.experimental.pallas import tpu as pltpu  # noqa: F401  (TPU backend)

# ---------------- synthetic config ----------------
B = 2                      # batch size
C_VIS, T_VIS, H_VIS, W_VIS = 4, 4, 16, 16     # visual clip: B x C x T x H x W
C_AUD, F_AUD, T_AUD = 2, 16, 16               # audio clip:  B x C x F x T
D_CONV = 32                # visual_conv.output_size == audio_conv.output_size
D_PROJ = 16                # cfg.CONTRAST.PROJECTION_SIZE
TEMPERATURE = 0.1          # cfg.CONTRAST.TEMPERATURE
BN_EPS = 1e-5              # cfg.MODEL.EPSILON
FC_INIT_STD = 0.01         # cfg.MODEL.FC_INIT_STD


# ---------------- fused forward kernel ----------------
def fused_contrast_kernel(x_ref, p_ref, out_ref, *, temperature, batch,
                          c_vis, s_vis, c_aud, s_aud, d_conv, d_proj):
    f32 = jnp.float32
    x = x_ref[...]                                   # (B*C_vis + B*C_aud, S_vis)

    # ---- unpack the single parameter slab (static, aligned row slices) ----
    vcw = p_ref[0:d_conv, :]                         # (D,128): cols 0:C_vis used
    acw = p_ref[d_conv:2 * d_conv, :]                # (D,128): cols 0:C_aud used
    vw1T = p_ref[2 * d_conv:3 * d_conv, :][:, 0:d_conv]                 # (D,D)
    aw1T = p_ref[3 * d_conv:4 * d_conv, :][:, 0:d_conv]                 # (D,D)
    vw2T = p_ref[4 * d_conv:4 * d_conv + d_proj, :][:, 0:d_conv]        # (P,D)
    aw2T = p_ref[4 * d_conv + d_proj:4 * d_conv + 2 * d_proj, :][:, 0:d_conv]
    bias = p_ref[4 * d_conv + 2 * d_proj:5 * d_conv + 2 * d_proj, :]    # (D,128)
    vcb = bias[:, 0:1]
    acb = bias[:, 1:2]
    vb1 = bias[:, 2:3]
    ab1 = bias[:, 3:4]
    vb2 = bias[0:d_proj, 4:5]
    ab2 = bias[0:d_proj, 5:6]

    # ---- shared iotas, built once and reused ----
    col_idx = jax.lax.broadcasted_iota(jnp.int32, (d_conv, batch), 1)   # (D,B)
    rr = jax.lax.broadcasted_iota(jnp.int32, (batch, batch), 0)
    cc = jax.lax.broadcasted_iota(jnp.int32, (batch, batch), 1)

    def backbone(w, b_col, row0, c_ch, s):
        # Stand-in backbone: 1x1 conv -> ReLU -> global average pool.
        # K = c_ch (2..4) contraction done on the VPU as an unrolled
        # broadcast-MAC over channels; S (1024/256) stays lane-dense.
        inv_s = 1.0 / float(s)
        feat = jnp.zeros((d_conv, batch), f32)
        for smp in range(batch):                     # B is tiny; static unroll
            acc = None
            for c in range(c_ch):
                row = row0 + smp * c_ch + c
                term = w[:, c:c + 1] * x[row:row + 1, 0:s]     # (D,1)*(1,S)
                acc = term if acc is None else acc + term
            z = jnp.maximum(acc + b_col, 0.0)                  # (D,S)
            pooled = jnp.sum(z, axis=-1, keepdims=True) * inv_s  # (D,1) GAP
            feat = feat + jnp.where(col_idx == smp, pooled, 0.0)
        return feat                                            # (D,B)

    v_feat = backbone(vcw, vcb, 0, c_vis, s_vis)
    a_feat = backbone(acw, acb, batch * c_vis, c_aud, s_aud)

    def mlp_norm(feat, w1T, b1, w2T, b2):
        # FFNLayer (feature-major): Linear -> (folded eval BN) -> ReLU ->
        # Linear, then F.normalize(dim=-1) per sample (per column here).
        h = jnp.dot(w1T, feat, preferred_element_type=f32) + b1
        h = jnp.maximum(h, 0.0)
        z = jnp.dot(w2T, h, preferred_element_type=f32) + b2   # (P,B)
        sumsq = jnp.sum(z * z, axis=0, keepdims=True)          # (1,B)
        # z / max(||z||,1e-12) == z * rsqrt(max(||z||^2,1e-24))
        return z * jax.lax.rsqrt(jnp.maximum(sumsq, 1e-24))

    out1 = mlp_norm(v_feat, vw1T, vb1, vw2T, vb2)              # (P,B) unit cols
    out2 = mlp_norm(a_feat, aw1T, ab1, aw2T, ab2)              # (P,B) unit cols

    # logits_ab[i,j] = <out1[:,i], out2[:,j]> / T ; logits_ba = logits_ab.T
    # (computed once, 1/T folded into one operand).
    dn = (((0,), (0,)), ((), ()))
    logits = jax.lax.dot_general(out1 * (1.0 / temperature), out2, dn,
                                 preferred_element_type=f32)   # (B,B)

    eye = rr == cc
    row_max = jnp.max(logits, axis=1, keepdims=True)           # (B,1)
    col_max = jnp.max(logits, axis=0, keepdims=True)           # (1,B)
    row_lse = row_max + jnp.log(jnp.sum(jnp.exp(logits - row_max),
                                        axis=1, keepdims=True))
    col_lse = col_max + jnp.log(jnp.sum(jnp.exp(logits - col_max),
                                        axis=0, keepdims=True))
    diag_m = jnp.where(eye, logits, 0.0)
    diag_r = jnp.sum(diag_m, axis=1, keepdims=True)            # logits[i,i]
    diag_c = jnp.sum(diag_m, axis=0, keepdims=True)            # logits[j,j]
    loss_sum = (jnp.sum(row_lse - diag_r, keepdims=True)
                + jnp.sum(col_lse - diag_c, keepdims=True))    # (1,1), 'sum'

    # top-1 accuracy, argmax with first-index tie breaking (matches torch).
    ccf = cc.astype(f32)
    rrf = rr.astype(f32)
    big = float(batch)
    argmax_r = jnp.min(jnp.where(logits >= row_max, ccf, big),
                       axis=1, keepdims=True)                  # (B,1)
    argmax_c = jnp.min(jnp.where(logits >= col_max, rrf, big),
                       axis=0, keepdims=True)                  # (1,B)
    lbl_r = rrf[:, 0:1]                                        # labels = arange
    lbl_c = ccf[0:1, :]
    corrects = (jnp.sum((argmax_r == lbl_r).astype(f32), keepdims=True)
                + jnp.sum((argmax_c == lbl_c).astype(f32), keepdims=True))

    # ---- single lane-dense output store: loss in lane 0, acc in lane 1 ----
    denom = 1.0 / (2.0 * batch)
    lane = jax.lax.broadcasted_iota(jnp.int32, (1, 128), 1)
    out_ref[...] = (jnp.where(lane == 0, loss_sum * denom, 0.0)
                    + jnp.where(lane == 1, corrects * denom * 100.0, 0.0))


# ---------------- host-side parameter prep ----------------
def fold_batchnorm(ffn_params, eps):
    """Fold eval-mode BatchNorm1d into the first Linear -> (w1', b1', w2, b2)."""
    w1, b1, gamma, beta, run_mean, run_var, w2, b2 = ffn_params
    scale = gamma * jax.lax.rsqrt(run_var + eps)               # (1, d_hid)
    return w1 * scale, (b1 - run_mean) * scale + beta, w2, b2


@jax.jit
def contrast_forward(visual_clip, audio_clip, params):
    bn = visual_clip.shape[0]
    # Pure reshapes (no host transpose of the big inputs): channel stays in
    # dim 1, sample/channel rows on sublanes, spatial axis lane-dense.
    v2 = visual_clip.reshape(bn * C_VIS, -1)        # (B*C_vis, T*H*W)
    a2 = audio_clip.reshape(bn * C_AUD, -1)         # (B*C_aud, F*T)
    s_vis = v2.shape[1]
    s_aud = a2.shape[1]

    # One activation slab -> one input DMA.
    x_slab = jnp.zeros((bn * C_VIS + bn * C_AUD, s_vis), jnp.float32)
    x_slab = x_slab.at[0:bn * C_VIS, :].set(v2)
    x_slab = x_slab.at[bn * C_VIS:, 0:s_aud].set(a2)

    # One parameter slab (lane-dense, 128 wide) -> one input DMA.
    vw1, vb1, vw2, vb2 = fold_batchnorm(params["vis_mlp"], BN_EPS)
    aw1, ab1, aw2, ab2 = fold_batchnorm(params["aud_mlp"], BN_EPS)

    p_slab = jnp.zeros((5 * D_CONV + 2 * D_PROJ, 128), jnp.float32)
    p_slab = p_slab.at[0:D_CONV, 0:C_VIS].set(params["vis_conv_w"].T)
    p_slab = p_slab.at[D_CONV:2 * D_CONV, 0:C_AUD].set(params["aud_conv_w"].T)
    p_slab = p_slab.at[2 * D_CONV:3 * D_CONV, 0:D_CONV].set(vw1.T)
    p_slab = p_slab.at[3 * D_CONV:4 * D_CONV, 0:D_CONV].set(aw1.T)
    p_slab = p_slab.at[4 * D_CONV:4 * D_CONV + D_PROJ, 0:D_CONV].set(vw2.T)
    p_slab = p_slab.at[4 * D_CONV + D_PROJ:4 * D_CONV + 2 * D_PROJ,
                       0:D_CONV].set(aw2.T)
    brow = 4 * D_CONV + 2 * D_PROJ
    p_slab = p_slab.at[brow:brow + D_CONV, 0].set(params["vis_conv_b"].reshape(-1))
    p_slab = p_slab.at[brow:brow + D_CONV, 1].set(params["aud_conv_b"].reshape(-1))
    p_slab = p_slab.at[brow:brow + D_CONV, 2].set(vb1.reshape(-1))
    p_slab = p_slab.at[brow:brow + D_CONV, 3].set(ab1.reshape(-1))
    p_slab = p_slab.at[brow:brow + D_PROJ, 4].set(vb2.reshape(-1))
    p_slab = p_slab.at[brow:brow + D_PROJ, 5].set(ab2.reshape(-1))

    res = pl.pallas_call(
        functools.partial(fused_contrast_kernel,
                          temperature=TEMPERATURE, batch=bn,
                          c_vis=C_VIS, s_vis=s_vis,
                          c_aud=C_AUD, s_aud=s_aud,
                          d_conv=D_CONV, d_proj=D_PROJ),
        out_shape=jax.ShapeDtypeStruct((1, 128), jnp.float32),
    )(x_slab, p_slab)
    return res[0, 0], res[0, 1]


# ---------------- parameter init (deterministic, init_weights-style) ----------------
def make_ffn_params(k_lin1, k_lin2, d_in, d_hid, d_out):
    w1 = jax.random.normal(k_lin1, (d_in, d_hid), jnp.float32) * FC_INIT_STD
    b1 = jnp.zeros((1, d_hid), jnp.float32)
    gamma = jnp.ones((1, d_hid), jnp.float32)
    beta = jnp.zeros((1, d_hid), jnp.float32)
    run_mean = jnp.zeros((1, d_hid), jnp.float32)
    run_var = jnp.ones((1, d_hid), jnp.float32)
    w2 = jax.random.normal(k_lin2, (d_hid, d_out), jnp.float32) * FC_INIT_STD
    b2 = jnp.zeros((1, d_out), jnp.float32)
    return (w1, b1, gamma, beta, run_mean, run_var, w2, b2)


def init_params(key):
    ks = jax.random.split(key, 6)
    return {
        "vis_conv_w": jax.random.normal(ks[0], (C_VIS, D_CONV), jnp.float32) * 0.02,
        "vis_conv_b": jnp.zeros((1, D_CONV), jnp.float32),
        "aud_conv_w": jax.random.normal(ks[1], (C_AUD, D_CONV), jnp.float32) * 0.02,
        "aud_conv_b": jnp.zeros((1, D_CONV), jnp.float32),
        "vis_mlp": make_ffn_params(ks[2], ks[3], D_CONV, D_CONV, D_PROJ),
        "aud_mlp": make_ffn_params(ks[4], ks[5], D_CONV, D_CONV, D_PROJ),
    }


if __name__ == "__main__":
    key = jax.random.PRNGKey(0)
    k_v, k_a, k_p = jax.random.split(key, 3)

    visual_clip = jax.random.normal(k_v, (B, C_VIS, T_VIS, H_VIS, W_VIS), jnp.float32)
    audio_clip = jax.random.normal(k_a, (B, C_AUD, F_AUD, T_AUD), jnp.float32)
    params = init_params(k_p)

    loss, acc = contrast_forward(visual_clip, audio_clip, params)
    loss = jax.block_until_ready(loss)
    acc = jax.block_until_ready(acc)
    print("KERNEL_OK")
</pallas_src>

<mosaic_0001>
module attributes {stable_mosaic.version = 11 : i64} {
  func.func @fused_contrast_kernel(%arg0: memref<12x1024xf32, #tpu.memory_space<vmem>>, %arg1: memref<192x128xf32, #tpu.memory_space<vmem>>, %arg2: memref<1x128xf32, #tpu.memory_space<vmem>>) attributes {dimension_semantics = [], scalar_prefetch = 0 : i64, scratch_operands = 0 : i64, tpu.core_type = #tpu.core_type<tc>} {
    %c0 = arith.constant 0 : index
    %c0_0 = arith.constant 0 : index
    %0 = vector.load %arg0[%c0, %c0_0] : memref<12x1024xf32, #tpu.memory_space<vmem>>, vector<12x1024xf32>
    %c0_1 = arith.constant 0 : index
    %c0_2 = arith.constant 0 : index
    %1 = vector.load %arg1[%c0_1, %c0_2] : memref<192x128xf32, #tpu.memory_space<vmem>>, vector<32x128xf32>
    %c32 = arith.constant 32 : index
    %c0_3 = arith.constant 0 : index
    %2 = vector.load %arg1[%c32, %c0_3] : memref<192x128xf32, #tpu.memory_space<vmem>>, vector<32x128xf32>
    %c64 = arith.constant 64 : index
    %c0_4 = arith.constant 0 : index
    %3 = vector.load %arg1[%c64, %c0_4] : memref<192x128xf32, #tpu.memory_space<vmem>>, vector<32x128xf32>
    %4 = vector.extract_strided_slice %3 {offsets = [0, 0], sizes = [32, 32], strides = [1, 1]} : vector<32x128xf32> to vector<32x32xf32>
    %c96 = arith.constant 96 : index
    %c0_5 = arith.constant 0 : index
    %5 = vector.load %arg1[%c96, %c0_5] : memref<192x128xf32, #tpu.memory_space<vmem>>, vector<32x128xf32>
    %6 = vector.extract_strided_slice %5 {offsets = [0, 0], sizes = [32, 32], strides = [1, 1]} : vector<32x128xf32> to vector<32x32xf32>
    %c128 = arith.constant 128 : index
    %c0_6 = arith.constant 0 : index
    %7 = vector.load %arg1[%c128, %c0_6] : memref<192x128xf32, #tpu.memory_space<vmem>>, vector<16x128xf32>
    %8 = vector.extract_strided_slice %7 {offsets = [0, 0], sizes = [16, 32], strides = [1, 1]} : vector<16x128xf32> to vector<16x32xf32>
    %c144 = arith.constant 144 : index
    %c0_7 = arith.constant 0 : index
    %9 = vector.load %arg1[%c144, %c0_7] : memref<192x128xf32, #tpu.memory_space<vmem>>, vector<16x128xf32>
    %10 = vector.extract_strided_slice %9 {offsets = [0, 0], sizes = [16, 32], strides = [1, 1]} : vector<16x128xf32> to vector<16x32xf32>
    %c160 = arith.constant 160 : index
    %c0_8 = arith.constant 0 : index
    %11 = vector.load %arg1[%c160, %c0_8] : memref<192x128xf32, #tpu.memory_space<vmem>>, vector<32x128xf32>
    %12 = vector.extract_strided_slice %11 {offsets = [0, 0], sizes = [32, 1], strides = [1, 1]} : vector<32x128xf32> to vector<32x1xf32>
    %13 = vector.extract_strided_slice %11 {offsets = [0, 1], sizes = [32, 1], strides = [1, 1]} : vector<32x128xf32> to vector<32x1xf32>
    %14 = vector.extract_strided_slice %11 {offsets = [0, 2], sizes = [32, 1], strides = [1, 1]} : vector<32x128xf32> to vector<32x1xf32>
    %15 = vector.extract_strided_slice %11 {offsets = [0, 3], sizes = [32, 1], strides = [1, 1]} : vector<32x128xf32> to vector<32x1xf32>
    %16 = vector.extract_strided_slice %11 {offsets = [0, 4], sizes = [16, 1], strides = [1, 1]} : vector<32x128xf32> to vector<16x1xf32>
    %17 = vector.extract_strided_slice %11 {offsets = [0, 5], sizes = [16, 1], strides = [1, 1]} : vector<32x128xf32> to vector<16x1xf32>
    %18 = tpu.iota {dimensions = array<i32: 1>} : vector<32x2xi32>
    %19 = tpu.iota {dimensions = array<i32: 0>} : vector<2x2xi32>
    %20 = tpu.iota {dimensions = array<i32: 1>} : vector<2x2xi32>
    %cst = arith.constant 0.000000e+00 : f32
    %21 = vector.broadcast %cst : f32 to vector<32x2xf32>
    %22 = vector.extract_strided_slice %1 {offsets = [0, 0], sizes = [32, 1], strides = [1, 1]} : vector<32x128xf32> to vector<32x1xf32>
    %23 = vector.extract_strided_slice %0 {offsets = [0, 0], sizes = [1, 1024], strides = [1, 1]} : vector<12x1024xf32> to vector<1x1024xf32>
    %24 = vector.broadcast %22 : vector<32x1xf32> to vector<32x1024xf32>
    %25 = vector.broadcast %23 : vector<1x1024xf32> to vector<32x1024xf32>
    %26 = arith.mulf %24, %25 : vector<32x1024xf32>
    %27 = vector.extract_strided_slice %1 {offsets = [0, 1], sizes = [32, 1], strides = [1, 1]} : vector<32x128xf32> to vector<32x1xf32>
    %28 = vector.extract_strided_slice %0 {offsets = [1, 0], sizes = [1, 1024], strides = [1, 1]} : vector<12x1024xf32> to vector<1x1024xf32>
    %29 = vector.broadcast %27 : vector<32x1xf32> to vector<32x1024xf32>
    %30 = vector.broadcast %28 : vector<1x1024xf32> to vector<32x1024xf32>
    %31 = arith.mulf %29, %30 : vector<32x1024xf32>
    %32 = arith.addf %26, %31 : vector<32x1024xf32>
    %33 = vector.extract_strided_slice %1 {offsets = [0, 2], sizes = [32, 1], strides = [1, 1]} : vector<32x128xf32> to vector<32x1xf32>
    %34 = vector.extract_strided_slice %0 {offsets = [2, 0], sizes = [1, 1024], strides = [1, 1]} : vector<12x1024xf32> to vector<1x1024xf32>
    %35 = vector.broadcast %33 : vector<32x1xf32> to vector<32x1024xf32>
    %36 = vector.broadcast %34 : vector<1x1024xf32> to vector<32x1024xf32>
    %37 = arith.mulf %35, %36 : vector<32x1024xf32>
    %38 = arith.addf %32, %37 : vector<32x1024xf32>
    %39 = vector.extract_strided_slice %1 {offsets = [0, 3], sizes = [32, 1], strides = [1, 1]} : vector<32x128xf32> to vector<32x1xf32>
    %40 = vector.extract_strided_slice %0 {offsets = [3, 0], sizes = [1, 1024], strides = [1, 1]} : vector<12x1024xf32> to vector<1x1024xf32>
    %41 = vector.broadcast %39 : vector<32x1xf32> to vector<32x1024xf32>
    %42 = vector.broadcast %40 : vector<1x1024xf32> to vector<32x1024xf32>
    %43 = arith.mulf %41, %42 : vector<32x1024xf32>
    %44 = arith.addf %38, %43 : vector<32x1024xf32>
    %45 = vector.broadcast %12 : vector<32x1xf32> to vector<32x1024xf32>
    %46 = arith.addf %44, %45 : vector<32x1024xf32>
    %cst_9 = arith.constant 0.000000e+00 : f32
    %47 = vector.broadcast %cst_9 : f32 to vector<32x1024xf32>
    %48 = arith.maximumf %46, %47 : vector<32x1024xf32>
    %cst_10 = arith.constant dense<0.000000e+00> : vector<32xf32>
    %49 = vector.multi_reduction <add>, %48, %cst_10 [1] : vector<32x1024xf32> to vector<32xf32>
    %50 = vector.shape_cast %49 : vector<32xf32> to vector<32x1xf32>
    %cst_11 = arith.constant 9.765625E-4 : f32
    %51 = vector.broadcast %cst_11 : f32 to vector<32x1xf32>
    %52 = arith.mulf %50, %51 : vector<32x1xf32>
    %c0_i32 = arith.constant 0 : i32
    %53 = vector.broadcast %c0_i32 : i32 to vector<32x2xi32>
    %54 = arith.cmpi eq, %18, %53 : vector<32x2xi32>
    %cst_12 = arith.constant 0.000000e+00 : f32
    %55 = vector.shape_cast %52 : vector<32x1xf32> to vector<32x1xf32>
    %56 = vector.broadcast %55 : vector<32x1xf32> to vector<32x2xf32>
    %57 = vector.broadcast %cst_12 : f32 to vector<32x2xf32>
    %58 = arith.select %54, %56, %57 : vector<32x2xi1>, vector<32x2xf32>
    %59 = arith.addf %21, %58 : vector<32x2xf32>
    %60 = vector.extract_strided_slice %1 {offsets = [0, 0], sizes = [32, 1], strides = [1, 1]} : vector<32x128xf32> to vector<32x1xf32>
    %61 = vector.extract_strided_slice %0 {offsets = [4, 0], sizes = [1, 1024], strides = [1, 1]} : vector<12x1024xf32> to vector<1x1024xf32>
    %62 = vector.broadcast %60 : vector<32x1xf32> to vector<32x1024xf32>
    %63 = vector.broadcast %61 : vector<1x1024xf32> to vector<32x1024xf32>
    %64 = arith.mulf %62, %63 : vector<32x1024xf32>
    %65 = vector.extract_strided_slice %1 {offsets = [0, 1], sizes = [32, 1], strides = [1, 1]} : vector<32x128xf32> to vector<32x1xf32>
    %66 = vector.extract_strided_slice %0 {offsets = [5, 0], sizes = [1, 1024], strides = [1, 1]} : vector<12x1024xf32> to vector<1x1024xf32>
    %67 = vector.broadcast %65 : vector<32x1xf32> to vector<32x1024xf32>
    %68 = vector.broadcast %66 : vector<1x1024xf32> to vector<32x1024xf32>
    %69 = arith.mulf %67, %68 : vector<32x1024xf32>
    %70 = arith.addf %64, %69 : vector<32x1024xf32>
    %71 = vector.extract_strided_slice %1 {offsets = [0, 2], sizes = [32, 1], strides = [1, 1]} : vector<32x128xf32> to vector<32x1xf32>
    %72 = vector.extract_strided_slice %0 {offsets = [6, 0], sizes = [1, 1024], strides = [1, 1]} : vector<12x1024xf32> to vector<1x1024xf32>
    %73 = vector.broadcast %71 : vector<32x1xf32> to vector<32x1024xf32>
    %74 = vector.broadcast %72 : vector<1x1024xf32> to vector<32x1024xf32>
    %75 = arith.mulf %73, %74 : vector<32x1024xf32>
    %76 = arith.addf %70, %75 : vector<32x1024xf32>
    %77 = vector.extract_strided_slice %1 {offsets = [0, 3], sizes = [32, 1], strides = [1, 1]} : vector<32x128xf32> to vector<32x1xf32>
    %78 = vector.extract_strided_slice %0 {offsets = [7, 0], sizes = [1, 1024], strides = [1, 1]} : vector<12x1024xf32> to vector<1x1024xf32>
    %79 = vector.broadcast %77 : vector<32x1xf32> to vector<32x1024xf32>
    %80 = vector.broadcast %78 : vector<1x1024xf32> to vector<32x1024xf32>
    %81 = arith.mulf %79, %80 : vector<32x1024xf32>
    %82 = arith.addf %76, %81 : vector<32x1024xf32>
    %83 = vector.broadcast %12 : vector<32x1xf32> to vector<32x1024xf32>
    %84 = arith.addf %82, %83 : vector<32x1024xf32>
    %cst_13 = arith.constant 0.000000e+00 : f32
    %85 = vector.broadcast %cst_13 : f32 to vector<32x1024xf32>
    %86 = arith.maximumf %84, %85 : vector<32x1024xf32>
    %cst_14 = arith.constant dense<0.000000e+00> : vector<32xf32>
    %87 = vector.multi_reduction <add>, %86, %cst_14 [1] : vector<32x1024xf32> to vector<32xf32>
    %88 = vector.shape_cast %87 : vector<32xf32> to vector<32x1xf32>
    %cst_15 = arith.constant 9.765625E-4 : f32
    %89 = vector.broadcast %cst_15 : f32 to vector<32x1xf32>
    %90 = arith.mulf %88, %89 : vector<32x1xf32>
    %c1_i32 = arith.constant 1 : i32
    %91 = vector.broadcast %c1_i32 : i32 to vector<32x2xi32>
    %92 = arith.cmpi eq, %18, %91 : vector<32x2xi32>
    %cst_16 = arith.constant 0.000000e+00 : f32
    %93 = vector.shape_cast %90 : vector<32x1xf32> to vector<32x1xf32>
    %94 = vector.broadcast %93 : vector<32x1xf32> to vector<32x2xf32>
    %95 = vector.broadcast %cst_16 : f32 to vector<32x2xf32>
    %96 = arith.select %92, %94, %95 : vector<32x2xi1>, vector<32x2xf32>
    %97 = arith.addf %59, %96 : vector<32x2xf32>
    %cst_17 = arith.constant 0.000000e+00 : f32
    %98 = vector.broadcast %cst_17 : f32 to vector<32x2xf32>
    %99 = vector.extract_strided_slice %2 {offsets = [0, 0], sizes = [32, 1], strides = [1, 1]} : vector<32x128xf32> to vector<32x1xf32>
    %100 = vector.extract_strided_slice %0 {offsets = [8, 0], sizes = [1, 256], strides = [1, 1]} : vector<12x1024xf32> to vector<1x256xf32>
    %101 = vector.broadcast %99 : vector<32x1xf32> to vector<32x256xf32>
    %102 = vector.broadcast %100 : vector<1x256xf32> to vector<32x256xf32>
    %103 = arith.mulf %101, %102 : vector<32x256xf32>
    %104 = vector.extract_strided_slice %2 {offsets = [0, 1], sizes = [32, 1], strides = [1, 1]} : vector<32x128xf32> to vector<32x1xf32>
    %105 = vector.extract_strided_slice %0 {offsets = [9, 0], sizes = [1, 256], strides = [1, 1]} : vector<12x1024xf32> to vector<1x256xf32>
    %106 = vector.broadcast %104 : vector<32x1xf32> to vector<32x256xf32>
    %107 = vector.broadcast %105 : vector<1x256xf32> to vector<32x256xf32>
    %108 = arith.mulf %106, %107 : vector<32x256xf32>
    %109 = arith.addf %103, %108 : vector<32x256xf32>
    %110 = vector.broadcast %13 : vector<32x1xf32> to vector<32x256xf32>
    %111 = arith.addf %109, %110 : vector<32x256xf32>
    %cst_18 = arith.constant 0.000000e+00 : f32
    %112 = vector.broadcast %cst_18 : f32 to vector<32x256xf32>
    %113 = arith.maximumf %111, %112 : vector<32x256xf32>
    %cst_19 = arith.constant dense<0.000000e+00> : vector<32xf32>
    %114 = vector.multi_reduction <add>, %113, %cst_19 [1] : vector<32x256xf32> to vector<32xf32>
    %115 = vector.shape_cast %114 : vector<32xf32> to vector<32x1xf32>
    %cst_20 = arith.constant 3.906250e-03 : f32
    %116 = vector.broadcast %cst_20 : f32 to vector<32x1xf32>
    %117 = arith.mulf %115, %116 : vector<32x1xf32>
    %c0_i32_21 = arith.constant 0 : i32
    %118 = vector.broadcast %c0_i32_21 : i32 to vector<32x2xi32>
    %119 = arith.cmpi eq, %18, %118 : vector<32x2xi32>
    %cst_22 = arith.constant 0.000000e+00 : f32
    %120 = vector.shape_cast %117 : vector<32x1xf32> to vector<32x1xf32>
    %121 = vector.broadcast %120 : vector<32x1xf32> to vector<32x2xf32>
    %122 = vector.broadcast %cst_22 : f32 to vector<32x2xf32>
    %123 = arith.select %119, %121, %122 : vector<32x2xi1>, vector<32x2xf32>
    %124 = arith.addf %98, %123 : vector<32x2xf32>
    %125 = vector.extract_strided_slice %2 {offsets = [0, 0], sizes = [32, 1], strides = [1, 1]} : vector<32x128xf32> to vector<32x1xf32>
    %126 = vector.extract_strided_slice %0 {offsets = [10, 0], sizes = [1, 256], strides = [1, 1]} : vector<12x1024xf32> to vector<1x256xf32>
    %127 = vector.broadcast %125 : vector<32x1xf32> to vector<32x256xf32>
    %128 = vector.broadcast %126 : vector<1x256xf32> to vector<32x256xf32>
    %129 = arith.mulf %127, %128 : vector<32x256xf32>
    %130 = vector.extract_strided_slice %2 {offsets = [0, 1], sizes = [32, 1], strides = [1, 1]} : vector<32x128xf32> to vector<32x1xf32>
    %131 = vector.extract_strided_slice %0 {offsets = [11, 0], sizes = [1, 256], strides = [1, 1]} : vector<12x1024xf32> to vector<1x256xf32>
    %132 = vector.broadcast %130 : vector<32x1xf32> to vector<32x256xf32>
    %133 = vector.broadcast %131 : vector<1x256xf32> to vector<32x256xf32>
    %134 = arith.mulf %132, %133 : vector<32x256xf32>
    %135 = arith.addf %129, %134 : vector<32x256xf32>
    %136 = vector.broadcast %13 : vector<32x1xf32> to vector<32x256xf32>
    %137 = arith.addf %135, %136 : vector<32x256xf32>
    %cst_23 = arith.constant 0.000000e+00 : f32
    %138 = vector.broadcast %cst_23 : f32 to vector<32x256xf32>
    %139 = arith.maximumf %137, %138 : vector<32x256xf32>
    %cst_24 = arith.constant dense<0.000000e+00> : vector<32xf32>
    %140 = vector.multi_reduction <add>, %139, %cst_24 [1] : vector<32x256xf32> to vector<32xf32>
    %141 = vector.shape_cast %140 : vector<32xf32> to vector<32x1xf32>
    %cst_25 = arith.constant 3.906250e-03 : f32
    %142 = vector.broadcast %cst_25 : f32 to vector<32x1xf32>
    %143 = arith.mulf %141, %142 : vector<32x1xf32>
    %c1_i32_26 = arith.constant 1 : i32
    %144 = vector.broadcast %c1_i32_26 : i32 to vector<32x2xi32>
    %145 = arith.cmpi eq, %18, %144 : vector<32x2xi32>
    %cst_27 = arith.constant 0.000000e+00 : f32
    %146 = vector.shape_cast %143 : vector<32x1xf32> to vector<32x1xf32>
    %147 = vector.broadcast %146 : vector<32x1xf32> to vector<32x2xf32>
    %148 = vector.broadcast %cst_27 : f32 to vector<32x2xf32>
    %149 = arith.select %145, %147, %148 : vector<32x2xi1>, vector<32x2xf32>
    %150 = arith.addf %124, %149 : vector<32x2xf32>
    %cst_28 = arith.constant dense<0.000000e+00> : vector<32x2xf32>
    %151 = tpu.matmul %4, %97, %cst_28 {dimension_numbers = #tpu.dot_dimension_numbers<[1], [0], [0], [1], [0, 0, 1, 1], [], []>} : vector<32x32xf32>, vector<32x2xf32>, vector<32x2xf32> -> vector<32x2xf32>
    %152 = vector.broadcast %14 : vector<32x1xf32> to vector<32x2xf32>
    %153 = arith.addf %151, %152 : vector<32x2xf32>
    %cst_29 = arith.constant 0.000000e+00 : f32
    %154 = vector.broadcast %cst_29 : f32 to vector<32x2xf32>
    %155 = arith.maximumf %153, %154 : vector<32x2xf32>
    %cst_30 = arith.constant dense<0.000000e+00> : vector<16x2xf32>
    %156 = tpu.matmul %8, %155, %cst_30 {dimension_numbers = #tpu.dot_dimension_numbers<[1], [0], [0], [1], [0, 0, 1, 1], [], []>} : vector<16x32xf32>, vector<32x2xf32>, vector<16x2xf32> -> vector<16x2xf32>
    %157 = vector.broadcast %16 : vector<16x1xf32> to vector<16x2xf32>
    %158 = arith.addf %156, %157 : vector<16x2xf32>
    %159 = arith.mulf %158, %158 : vector<16x2xf32>
    %cst_31 = arith.constant dense<0.000000e+00> : vector<2xf32>
    %160 = vector.multi_reduction <add>, %159, %cst_31 [0] : vector<16x2xf32> to vector<2xf32>
    %161 = vector.shape_cast %160 : vector<2xf32> to vector<1x2xf32>
    %cst_32 = arith.constant 1.000000e-24 : f32
    %162 = vector.broadcast %cst_32 : f32 to vector<1x2xf32>
    %163 = arith.maximumf %161, %162 : vector<1x2xf32>
    %164 = math.rsqrt %163 : vector<1x2xf32>
    %165 = vector.broadcast %164 : vector<1x2xf32> to vector<16x2xf32>
    %166 = arith.mulf %158, %165 : vector<16x2xf32>
    %cst_33 = arith.constant dense<0.000000e+00> : vector<32x2xf32>
    %167 = tpu.matmul %6, %150, %cst_33 {dimension_numbers = #tpu.dot_dimension_numbers<[1], [0], [0], [1], [0, 0, 1, 1], [], []>} : vector<32x32xf32>, vector<32x2xf32>, vector<32x2xf32> -> vector<32x2xf32>
    %168 = vector.broadcast %15 : vector<32x1xf32> to vector<32x2xf32>
    %169 = arith.addf %167, %168 : vector<32x2xf32>
    %cst_34 = arith.constant 0.000000e+00 : f32
    %170 = vector.broadcast %cst_34 : f32 to vector<32x2xf32>
    %171 = arith.maximumf %169, %170 : vector<32x2xf32>
    %cst_35 = arith.constant dense<0.000000e+00> : vector<16x2xf32>
    %172 = tpu.matmul %10, %171, %cst_35 {dimension_numbers = #tpu.dot_dimension_numbers<[1], [0], [0], [1], [0, 0, 1, 1], [], []>} : vector<16x32xf32>, vector<32x2xf32>, vector<16x2xf32> -> vector<16x2xf32>
    %173 = vector.broadcast %17 : vector<16x1xf32> to vector<16x2xf32>
    %174 = arith.addf %172, %173 : vector<16x2xf32>
    %175 = arith.mulf %174, %174 : vector<16x2xf32>
    %cst_36 = arith.constant dense<0.000000e+00> : vector<2xf32>
    %176 = vector.multi_reduction <add>, %175, %cst_36 [0] : vector<16x2xf32> to vector<2xf32>
    %177 = vector.shape_cast %176 : vector<2xf32> to vector<1x2xf32>
    %cst_37 = arith.constant 1.000000e-24 : f32
    %178 = vector.broadcast %cst_37 : f32 to vector<1x2xf32>
    %179 = arith.maximumf %177, %178 : vector<1x2xf32>
    %180 = math.rsqrt %179 : vector<1x2xf32>
    %181 = vector.broadcast %180 : vector<1x2xf32> to vector<16x2xf32>
    %182 = arith.mulf %174, %181 : vector<16x2xf32>
    %cst_38 = arith.constant 1.000000e+01 : f32
    %183 = vector.broadcast %cst_38 : f32 to vector<16x2xf32>
    %184 = arith.mulf %166, %183 : vector<16x2xf32>
    %cst_39 = arith.constant dense<0.000000e+00> : vector<2x2xf32>
    %185 = tpu.matmul %184, %182, %cst_39 {dimension_numbers = #tpu.dot_dimension_numbers<[0], [0], [1], [1], [0, 1, 1, 1], [], []>} : vector<16x2xf32>, vector<16x2xf32>, vector<2x2xf32> -> vector<2x2xf32>
    %186 = arith.cmpi eq, %19, %20 : vector<2x2xi32>
    %cst_40 = arith.constant dense<0xFF800000> : vector<2xf32>
    %187 = vector.multi_reduction <maximumf>, %185, %cst_40 [1] : vector<2x2xf32> to vector<2xf32>
    %188 = vector.shape_cast %187 : vector<2xf32> to vector<2x1xf32>
    %cst_41 = arith.constant dense<0xFF800000> : vector<2xf32>
    %189 = vector.multi_reduction <maximumf>, %185, %cst_41 [0] : vector<2x2xf32> to vector<2xf32>
    %190 = vector.shape_cast %189 : vector<2xf32> to vector<1x2xf32>
    %191 = vector.broadcast %188 : vector<2x1xf32> to vector<2x2xf32>
    %192 = arith.subf %185, %191 : vector<2x2xf32>
    %193 = math.exp %192 : vector<2x2xf32>
    %cst_42 = arith.constant dense<0.000000e+00> : vector<2xf32>
    %194 = vector.multi_reduction <add>, %193, %cst_42 [1] : vector<2x2xf32> to vector<2xf32>
    %195 = vector.shape_cast %194 : vector<2xf32> to vector<2x1xf32>
    %196 = math.log %195 : vector<2x1xf32>
    %197 = arith.addf %188, %196 : vector<2x1xf32>
    %198 = vector.broadcast %190 : vector<1x2xf32> to vector<2x2xf32>
    %199 = arith.subf %185, %198 : vector<2x2xf32>
    %200 = math.exp %199 : vector<2x2xf32>
    %cst_43 = arith.constant dense<0.000000e+00> : vector<2xf32>
    %201 = vector.multi_reduction <add>, %200, %cst_43 [0] : vector<2x2xf32> to vector<2xf32>
    %202 = vector.shape_cast %201 : vector<2xf32> to vector<1x2xf32>
    %203 = math.log %202 : vector<1x2xf32>
    %204 = arith.addf %190, %203 : vector<1x2xf32>
    %cst_44 = arith.constant 0.000000e+00 : f32
    %205 = vector.broadcast %cst_44 : f32 to vector<2x2xf32>
    %206 = arith.select %186, %185, %205 : vector<2x2xi1>, vector<2x2xf32>
    %cst_45 = arith.constant dense<0.000000e+00> : vector<2xf32>
    %207 = vector.multi_reduction <add>, %206, %cst_45 [1] : vector<2x2xf32> to vector<2xf32>
    %208 = vector.shape_cast %207 : vector<2xf32> to vector<2x1xf32>
    %cst_46 = arith.constant dense<0.000000e+00> : vector<2xf32>
    %209 = vector.multi_reduction <add>, %206, %cst_46 [0] : vector<2x2xf32> to vector<2xf32>
    %210 = vector.shape_cast %209 : vector<2xf32> to vector<1x2xf32>
    %211 = arith.subf %197, %208 : vector<2x1xf32>
    %212 = vector.shape_cast %211 : vector<2x1xf32> to vector<1x2x1xf32>
    %cst_47 = arith.constant dense<0.000000e+00> : vector<1xf32>
    %213 = vector.multi_reduction <add>, %212, %cst_47 [1, 2] : vector<1x2x1xf32> to vector<1xf32>
    %214 = vector.shape_cast %213 : vector<1xf32> to vector<1x1x1xf32>
    %215 = vector.extract %214[0, 0, 0] : f32 from vector<1x1x1xf32>
    %216 = vector.broadcast %215 : f32 to vector<1x1xf32>
    %217 = arith.subf %204, %210 : vector<1x2xf32>
    %218 = vector.shape_cast %217 : vector<1x2xf32> to vector<1x1x2xf32>
    %cst_48 = arith.constant dense<0.000000e+00> : vector<1xf32>
    %219 = vector.multi_reduction <add>, %218, %cst_48 [1, 2] : vector<1x1x2xf32> to vector<1xf32>
    %220 = vector.shape_cast %219 : vector<1xf32> to vector<1x1x1xf32>
    %221 = vector.extract %220[0, 0, 0] : f32 from vector<1x1x1xf32>
    %222 = vector.broadcast %221 : f32 to vector<1x1xf32>
    %223 = arith.addf %216, %222 : vector<1x1xf32>
    %224 = arith.sitofp %20 : vector<2x2xi32> to vector<2x2xf32>
    %225 = arith.sitofp %19 : vector<2x2xi32> to vector<2x2xf32>
    %226 = vector.broadcast %188 : vector<2x1xf32> to vector<2x2xf32>
    %227 = arith.cmpf oge, %185, %226 : vector<2x2xf32>
    %cst_49 = arith.constant 2.000000e+00 : f32
    %228 = vector.broadcast %cst_49 : f32 to vector<2x2xf32>
    %229 = arith.select %227, %224, %228 : vector<2x2xi1>, vector<2x2xf32>
    %cst_50 = arith.constant dense<0x7F800000> : vector<2xf32>
    %230 = vector.multi_reduction <minimumf>, %229, %cst_50 [1] : vector<2x2xf32> to vector<2xf32>
    %231 = vector.shape_cast %230 : vector<2xf32> to vector<2x1xf32>
    %232 = vector.broadcast %190 : vector<1x2xf32> to vector<2x2xf32>
    %233 = arith.cmpf oge, %185, %232 : vector<2x2xf32>
    %cst_51 = arith.constant 2.000000e+00 : f32
    %234 = vector.broadcast %cst_51 : f32 to vector<2x2xf32>
    %235 = arith.select %233, %225, %234 : vector<2x2xi1>, vector<2x2xf32>
    %cst_52 = arith.constant dense<0x7F800000> : vector<2xf32>
    %236 = vector.multi_reduction <minimumf>, %235, %cst_52 [0] : vector<2x2xf32> to vector<2xf32>
    %237 = vector.shape_cast %236 : vector<2xf32> to vector<1x2xf32>
    %238 = vector.extract_strided_slice %225 {offsets = [0, 0], sizes = [2, 1], strides = [1, 1]} : vector<2x2xf32> to vector<2x1xf32>
    %239 = vector.extract_strided_slice %224 {offsets = [0, 0], sizes = [1, 2], strides = [1, 1]} : vector<2x2xf32> to vector<1x2xf32>
    %240 = arith.cmpf oeq, %231, %238 : vector<2x1xf32>
    %241 = arith.extui %240 : vector<2x1xi1> to vector<2x1xi32>
    %242 = arith.sitofp %241 : vector<2x1xi32> to vector<2x1xf32>
    %243 = vector.shape_cast %242 : vector<2x1xf32> to vector<1x2x1xf32>
    %cst_53 = arith.constant dense<0.000000e+00> : vector<1xf32>
    %244 = vector.multi_reduction <add>, %243, %cst_53 [1, 2] : vector<1x2x1xf32> to vector<1xf32>
    %245 = vector.shape_cast %244 : vector<1xf32> to vector<1x1x1xf32>
    %246 = vector.extract %245[0, 0, 0] : f32 from vector<1x1x1xf32>
    %247 = vector.broadcast %246 : f32 to vector<1x1xf32>
    %248 = arith.cmpf oeq, %237, %239 : vector<1x2xf32>
    %249 = arith.extui %248 : vector<1x2xi1> to vector<1x2xi32>
    %250 = arith.sitofp %249 : vector<1x2xi32> to vector<1x2xf32>
    %251 = vector.shape_cast %250 : vector<1x2xf32> to vector<1x1x2xf32>
    %cst_54 = arith.constant dense<0.000000e+00> : vector<1xf32>
    %252 = vector.multi_reduction <add>, %251, %cst_54 [1, 2] : vector<1x1x2xf32> to vector<1xf32>
    %253 = vector.shape_cast %252 : vector<1xf32> to vector<1x1x1xf32>
    %254 = vector.extract %253[0, 0, 0] : f32 from vector<1x1x1xf32>
    %255 = vector.broadcast %254 : f32 to vector<1x1xf32>
    %256 = arith.addf %247, %255 : vector<1x1xf32>
    %257 = tpu.iota {dimensions = array<i32: 1>} : vector<1x128xi32>
    %c0_i32_55 = arith.constant 0 : i32
    %258 = vector.broadcast %c0_i32_55 : i32 to vector<1x128xi32>
    %259 = arith.cmpi eq, %257, %258 : vector<1x128xi32>
    %cst_56 = arith.constant 2.500000e-01 : f32
    %260 = vector.broadcast %cst_56 : f32 to vector<1x1xf32>
    %261 = arith.mulf %223, %260 : vector<1x1xf32>
    %cst_57 = arith.constant 0.000000e+00 : f32
    %262 = vector.shape_cast %261 : vector<1x1xf32> to vector<1x1xf32>
    %263 = vector.broadcast %262 : vector<1x1xf32> to vector<1x128xf32>
    %264 = vector.broadcast %cst_57 : f32 to vector<1x128xf32>
    %265 = arith.select %259, %263, %264 : vector<1x128xi1>, vector<1x128xf32>
    %c1_i32_58 = arith.constant 1 : i32
    %266 = vector.broadcast %c1_i32_58 : i32 to vector<1x128xi32>
    %267 = arith.cmpi eq, %257, %266 : vector<1x128xi32>
    %cst_59 = arith.constant 2.500000e-01 : f32
    %268 = vector.broadcast %cst_59 : f32 to vector<1x1xf32>
    %269 = arith.mulf %256, %268 : vector<1x1xf32>
    %cst_60 = arith.constant 1.000000e+02 : f32
    %270 = vector.broadcast %cst_60 : f32 to vector<1x1xf32>
    %271 = arith.mulf %269, %270 : vector<1x1xf32>
    %cst_61 = arith.constant 0.000000e+00 : f32
    %272 = vector.shape_cast %271 : vector<1x1xf32> to vector<1x1xf32>
    %273 = vector.broadcast %272 : vector<1x1xf32> to vector<1x128xf32>
    %274 = vector.broadcast %cst_61 : f32 to vector<1x128xf32>
    %275 = arith.select %267, %273, %274 : vector<1x128xi1>, vector<1x128xf32>
    %276 = arith.addf %265, %275 : vector<1x128xf32>
    %c0_62 = arith.constant 0 : index
    %c0_63 = arith.constant 0 : index
    %277 = vector.load %arg2[%c0_62, %c0_63] : memref<1x128xf32, #tpu.memory_space<vmem>>, vector<1x128xf32>
    tpu.vector_store %arg2[%c0_62, %c0_63], %276 {strides = array<i32>} : memref<1x128xf32, #tpu.memory_space<vmem>>, vector<1x128xf32>,
    return
  }
}

</mosaic_0001>

<llo_original>
// kernel: contrast_forward.1
$region0: #{contrast_forward.1}
  #allocation0 [shape = 'u32[]', space=smem, size = 0x4, offset = 0x4, fixed_abs, tag = 'smem constant byte address 0x4 - core index']
  #allocation1 [shape = 'u32[144,128]{1,0:T(1,128)}', space=vmem, size = 0x12000, scoped, tag = 'internal scratch']
  %s0 = inlined_call_operand.vmem [shape: f32[12,1024], index: 0, kind: input, shape index: {}]
  %s1 = inlined_call_operand.vmem [shape: f32[192,128], index: 1, kind: input, shape index: {}]
  %s2 = inlined_call_operand.vmem [shape: f32[1,128], index: 2, kind: output, shape index: {}]
  %s3 = sld [smem:[#allocation0]]
  $region18: #{contrast_forward.1} parent=0
    _
  %s5 = ssub.s32 1, %s3
  %s6 = scalar_select 0, %s5, %s3
  // Predicated region
  $region2: #{contrast_forward.1} parent=0 // pred_check
    _
  $region3: #{contrast_forward.1} parent=0 // pred_check_branch
    %8 = sbr.rel (0) target = $region5
  $region4: #{contrast_forward.1} parent=0 // pred_region
    _
  $region5: #{contrast_forward.1} parent=0 // pred_fallthru
    _
  // Predicated region
  $region6: #{contrast_forward.1} parent=0 // pred_check
    _
  $region7: #{contrast_forward.1} parent=0 // pred_check_branch
    %10 = sbr.rel (0) target = $region9
  $region8: #{contrast_forward.1} parent=0 // pred_region
    _
  $region9: #{contrast_forward.1} parent=0 // pred_fallthru
    _
  %v11 = vld [vmem:[%s0] sm:$0xff]
  %v12 = vld [vmem:[%s0 + $0x8] sm:$0xff]
  %v13 = vld [vmem:[%s0 + $0x10] sm:$0xff]
  %v14 = vld [vmem:[%s0 + $0x18] sm:$0xff]
  %v15 = vld [vmem:[%s0 + $0x20] sm:$0xff]
  %v16 = vld [vmem:[%s0 + $0x28] sm:$0xff]
  %v17 = vld [vmem:[%s0 + $0x30] sm:$0xff]
  %v18 = vld [vmem:[%s0 + $0x38] sm:$0xff]
  %v19 = vld [vmem:[%s0 + $0x40] sm:$0xf]
  %v20 = vld [vmem:[%s0 + $0x48] sm:$0xf]
  %v21 = vld [vmem:[%s1] sm:$0xff]
  %v22 = vld [vmem:[%s1 + $0x8] sm:$0xff]
  %v23 = vld [vmem:[%s1 + $0x10] sm:$0xff]
  %v24 = vld [vmem:[%s1 + $0x18] sm:$0xff]
  %v25 = vld [vmem:[%s1 + $0x20] sm:$0xff]
  %v26 = vld [vmem:[%s1 + $0x28] sm:$0xff]
  %v27 = vld [vmem:[%s1 + $0x30] sm:$0xff]
  %v28 = vld [vmem:[%s1 + $0x38] sm:$0xff]
  %v29 = vld [vmem:[%s1 + $0x40] sm:$0xff]
  %v30 = vld [vmem:[%s1 + $0x48] sm:$0xff]
  %v31 = vld [vmem:[%s1 + $0x50] sm:$0xff]
  %v32 = vld [vmem:[%s1 + $0x58] sm:$0xff]
  %v33 = vld [vmem:[%s1 + $0x60] sm:$0xff]
  %v34 = vld [vmem:[%s1 + $0x68] sm:$0xff]
  %v35 = vld [vmem:[%s1 + $0x70] sm:$0xff]
  %v36 = vld [vmem:[%s1 + $0x78] sm:$0xff]
  %v37 = vld [vmem:[%s1 + $0x80] sm:$0xff]
  %v38 = vld [vmem:[%s1 + $0x88] sm:$0xff]
  %v39 = vld [vmem:[%s1 + $0x90] sm:$0xff]
  %v40 = vld [vmem:[%s1 + $0x98] sm:$0xff]
  %v41 = vld [vmem:[%s1 + $0xa0] sm:$0xff]
  %v42 = vld [vmem:[%s1 + $0xa8] sm:$0xff]
  %v43 = vld [vmem:[%s1 + $0xb0] sm:$0xff]
  %v44 = vld [vmem:[%s1 + $0xb8] sm:$0xff]
  %v45 = vlaneseq
  %v46 = vand.u32 %v45, 127
  %v47 = vlaneseq
  %v48 = vshrl.u32 %v47, 7
  %50 = vset.pattern.permute.xlu0 0
  %51 = vperm.xlu0 %50, %v21
  %v52 = vpop.permute.xlu0 %51
  %55 = vset.pattern.permute.xlu0 0
  %56 = vperm.xlu0 %55, %v22
  %v57 = vpop.permute.xlu0 %56
  %60 = vset.pattern.permute.xlu0 0
  %61 = vperm.xlu0 %60, %v23
  %v62 = vpop.permute.xlu0 %61
  %65 = vset.pattern.permute.xlu0 0
  %66 = vperm.xlu0 %65, %v24
  %v67 = vpop.permute.xlu0 %66
  %v69 = vlaneseq
  %v70 = vshrl.u32 %v69, 7
  %v71 = vsub.s32 0, %v70
  %v72 = vrot.slane %v11, %v71
  %v73 = vlaneseq
  %v74 = vshrl.u32 %v73, 7
  %v75 = vsub.s32 0, %v74
  %v76 = vrot.slane %v12, %v75
  %v77 = vlaneseq
  %v78 = vshrl.u32 %v77, 7
  %v79 = vsub.s32 0, %v78
  %v80 = vrot.slane %v13, %v79
  %v81 = vlaneseq
  %v82 = vshrl.u32 %v81, 7
  %v83 = vsub.s32 0, %v82
  %v84 = vrot.slane %v14, %v83
  %v85 = vlaneseq
  %v86 = vshrl.u32 %v85, 7
  %v87 = vsub.s32 0, %v86
  %v88 = vrot.slane %v15, %v87
  %v89 = vlaneseq
  %v90 = vshrl.u32 %v89, 7
  %v91 = vsub.s32 0, %v90
  %v92 = vrot.slane %v16, %v91
  %v93 = vlaneseq
  %v94 = vshrl.u32 %v93, 7
  %v95 = vsub.s32 0, %v94
  %v96 = vrot.slane %v17, %v95
  %v97 = vlaneseq
  %v98 = vshrl.u32 %v97, 7
  %v99 = vsub.s32 0, %v98
  %v100 = vrot.slane %v18, %v99
  %v101 = vmul.f32 %v52, %v72
  %v102 = vmul.f32 %v52, %v76
  %v103 = vmul.f32 %v52, %v80
  %v104 = vmul.f32 %v52, %v84
  %v105 = vmul.f32 %v52, %v88
  %v106 = vmul.f32 %v52, %v92
  %v107 = vmul.f32 %v52, %v96
  %v108 = vmul.f32 %v52, %v100
  %v109 = vmul.f32 %v57, %v72
  %v110 = vmul.f32 %v57, %v76
  %v111 = vmul.f32 %v57, %v80
  %v112 = vmul.f32 %v57, %v84
  %v113 = vmul.f32 %v57, %v88
  %v114 = vmul.f32 %v57, %v92
  %v115 = vmul.f32 %v57, %v96
  %v116 = vmul.f32 %v57, %v100
  %v117 = vmul.f32 %v62, %v72
  %v118 = vmul.f32 %v62, %v76
  %v119 = vmul.f32 %v62, %v80
  %v120 = vmul.f32 %v62, %v84
  %v121 = vmul.f32 %v62, %v88
  %v122 = vmul.f32 %v62, %v92
  %v123 = vmul.f32 %v62, %v96
  %v124 = vmul.f32 %v62, %v100
  %v125 = vmul.f32 %v67, %v72
  %v126 = vmul.f32 %v67, %v76
  %v127 = vmul.f32 %v67, %v80
  %v128 = vmul.f32 %v67, %v84
  %v129 = vmul.f32 %v67, %v88
  %v130 = vmul.f32 %v67, %v92
  %v131 = vmul.f32 %v67, %v96
  %v132 = vmul.f32 %v67, %v100
  %133 = vset.pattern.permute.xlu0 1
  %134 = vperm.xlu0 %133, %v21
  %v135 = vpop.permute.xlu0 %134
  %137 = vset.pattern.permute.xlu0 1
  %138 = vperm.xlu0 %137, %v22
  %v139 = vpop.permute.xlu0 %138
  %141 = vset.pattern.permute.xlu0 1
  %142 = vperm.xlu0 %141, %v23
  %v143 = vpop.permute.xlu0 %142
  %145 = vset.pattern.permute.xlu0 1
  %146 = vperm.xlu0 %145, %v24
  %v147 = vpop.permute.xlu0 %146
  %v149 = vlaneseq
  %v150 = vshrl.u32 %v149, 7
  %v151 = vsub.s32 1, %v150
  %v152 = vrot.slane %v11, %v151
  %v153 = vlaneseq
  %v154 = vshrl.u32 %v153, 7
  %v155 = vsub.s32 1, %v154
  %v156 = vrot.slane %v12, %v155
  %v157 = vlaneseq
  %v158 = vshrl.u32 %v157, 7
  %v159 = vsub.s32 1, %v158
  %v160 = vrot.slane %v13, %v159
  %v161 = vlaneseq
  %v162 = vshrl.u32 %v161, 7
  %v163 = vsub.s32 1, %v162
  %v164 = vrot.slane %v14, %v163
  %v165 = vlaneseq
  %v166 = vshrl.u32 %v165, 7
  %v167 = vsub.s32 1, %v166
  %v168 = vrot.slane %v15, %v167
  %v169 = vlaneseq
  %v170 = vshrl.u32 %v169, 7
  %v171 = vsub.s32 1, %v170
  %v172 = vrot.slane %v16, %v171
  %v173 = vlaneseq
  %v174 = vshrl.u32 %v173, 7
  %v175 = vsub.s32 1, %v174
  %v176 = vrot.slane %v17, %v175
  %v177 = vlaneseq
  %v178 = vshrl.u32 %v177, 7
  %v179 = vsub.s32 1, %v178
  %v180 = vrot.slane %v18, %v179
  %v181 = vmul.f32 %v135, %v152
  %v182 = vmul.f32 %v135, %v156
  %v183 = vmul.f32 %v135, %v160
  %v184 = vmul.f32 %v135, %v164
  %v185 = vmul.f32 %v135, %v168
  %v186 = vmul.f32 %v135, %v172
  %v187 = vmul.f32 %v135, %v176
  %v188 = vmul.f32 %v135, %v180
  %v189 = vmul.f32 %v139, %v152
  %v190 = vmul.f32 %v139, %v156
  %v191 = vmul.f32 %v139, %v160
  %v192 = vmul.f32 %v139, %v164
  %v193 = vmul.f32 %v139, %v168
  %v194 = vmul.f32 %v139, %v172
  %v195 = vmul.f32 %v139, %v176
  %v196 = vmul.f32 %v139, %v180
  %v197 = vmul.f32 %v143, %v152
  %v198 = vmul.f32 %v143, %v156
  %v199 = vmul.f32 %v143, %v160
  %v200 = vmul.f32 %v143, %v164
  %v201 = vmul.f32 %v143, %v168
  %v202 = vmul.f32 %v143, %v172
  %v203 = vmul.f32 %v143, %v176
  %v204 = vmul.f32 %v143, %v180
  %v205 = vmul.f32 %v147, %v152
  %v206 = vmul.f32 %v147, %v156
  %v207 = vmul.f32 %v147, %v160
  %v208 = vmul.f32 %v147, %v164
  %v209 = vmul.f32 %v147, %v168
  %v210 = vmul.f32 %v147, %v172
  %v211 = vmul.f32 %v147, %v176
  %v212 = vmul.f32 %v147, %v180
  %v213 = vadd.f32 %v101, %v181
  %v214 = vadd.f32 %v102, %v182
  %v215 = vadd.f32 %v103, %v183
  %v216 = vadd.f32 %v104, %v184
  %v217 = vadd.f32 %v105, %v185
  %v218 = vadd.f32 %v106, %v186
  %v219 = vadd.f32 %v107, %v187
  %v220 = vadd.f32 %v108, %v188
  %v221 = vadd.f32 %v109, %v189
  %v222 = vadd.f32 %v110, %v190
  %v223 = vadd.f32 %v111, %v191
  %v224 = vadd.f32 %v112, %v192
  %v225 = vadd.f32 %v113, %v193
  %v226 = vadd.f32 %v114, %v194
  %v227 = vadd.f32 %v115, %v195
  %v228 = vadd.f32 %v116, %v196
  %v229 = vadd.f32 %v117, %v197
  %v230 = vadd.f32 %v118, %v198
  %v231 = vadd.f32 %v119, %v199
  %v232 = vadd.f32 %v120, %v200
  %v233 = vadd.f32 %v121, %v201
  %v234 = vadd.f32 %v122, %v202
  %v235 = vadd.f32 %v123, %v203
  %v236 = vadd.f32 %v124, %v204
  %v237 = vadd.f32 %v125, %v205
  %v238 = vadd.f32 %v126, %v206
  %v239 = vadd.f32 %v127, %v207
  %v240 = vadd.f32 %v128, %v208
  %v241 = vadd.f32 %v129, %v209
  %v242 = vadd.f32 %v130, %v210
  %v243 = vadd.f32 %v131, %v211
  %v244 = vadd.f32 %v132, %v212
  %245 = vset.pattern.permute.xlu0 2
  %246 = vperm.xlu0 %245, %v21
  %v247 = vpop.permute.xlu0 %246
  %249 = vset.pattern.permute.xlu0 2
  %250 = vperm.xlu0 %249, %v22
  %v251 = vpop.permute.xlu0 %250
  %253 = vset.pattern.permute.xlu0 2
  %254 = vperm.xlu0 %253, %v23
  %v255 = vpop.permute.xlu0 %254
  %257 = vset.pattern.permute.xlu0 2
  %258 = vperm.xlu0 %257, %v24
  %v259 = vpop.permute.xlu0 %258
  %v261 = vlaneseq
  %v262 = vshrl.u32 %v261, 7
  %v263 = vsub.s32 2, %v262
  %v264 = vrot.slane %v11, %v263
  %v265 = vlaneseq
  %v266 = vshrl.u32 %v265, 7
  %v267 = vsub.s32 2, %v266
  %v268 = vrot.slane %v12, %v267
  %v269 = vlaneseq
  %v270 = vshrl.u32 %v269, 7
  %v271 = vsub.s32 2, %v270
  %v272 = vrot.slane %v13, %v271
  %v273 = vlaneseq
  %v274 = vshrl.u32 %v273, 7
  %v275 = vsub.s32 2, %v274
  %v276 = vrot.slane %v14, %v275
  %v277 = vlaneseq
  %v278 = vshrl.u32 %v277, 7
  %v279 = vsub.s32 2, %v278
  %v280 = vrot.slane %v15, %v279
  %v281 = vlaneseq
  %v282 = vshrl.u32 %v281, 7
  %v283 = vsub.s32 2, %v282
  %v284 = vrot.slane %v16, %v283
  %v285 = vlaneseq
  %v286 = vshrl.u32 %v285, 7
  %v287 = vsub.s32 2, %v286
  %v288 = vrot.slane %v17, %v287
  %v289 = vlaneseq
  %v290 = vshrl.u32 %v289, 7
  %v291 = vsub.s32 2, %v290
  %v292 = vrot.slane %v18, %v291
  %v293 = vmul.f32 %v247, %v264
  %v294 = vmul.f32 %v247, %v268
  %v295 = vmul.f32 %v247, %v272
  %v296 = vmul.f32 %v247, %v276
  %v297 = vmul.f32 %v247, %v280
  %v298 = vmul.f32 %v247, %v284
  %v299 = vmul.f32 %v247, %v288
  %v300 = vmul.f32 %v247, %v292
  %v301 = vmul.f32 %v251, %v264
  %v302 = vmul.f32 %v251, %v268
  %v303 = vmul.f32 %v251, %v272
  %v304 = vmul.f32 %v251, %v276
  %v305 = vmul.f32 %v251, %v280
  %v306 = vmul.f32 %v251, %v284
  %v307 = vmul.f32 %v251, %v288
  %v308 = vmul.f32 %v251, %v292
  %v309 = vmul.f32 %v255, %v264
  %v310 = vmul.f32 %v255, %v268
  %v311 = vmul.f32 %v255, %v272
  %v312 = vmul.f32 %v255, %v276
  %v313 = vmul.f32 %v255, %v280
  %v314 = vmul.f32 %v255, %v284
  %v315 = vmul.f32 %v255, %v288
  %v316 = vmul.f32 %v255, %v292
  %v317 = vmul.f32 %v259, %v264
  %v318 = vmul.f32 %v259, %v268
  %v319 = vmul.f32 %v259, %v272
  %v320 = vmul.f32 %v259, %v276
  %v321 = vmul.f32 %v259, %v280
  %v322 = vmul.f32 %v259, %v284
  %v323 = vmul.f32 %v259, %v288
  %v324 = vmul.f32 %v259, %v292
  %v325 = vadd.f32 %v213, %v293
  %v326 = vadd.f32 %v214, %v294
  %v327 = vadd.f32 %v215, %v295
  %v328 = vadd.f32 %v216, %v296
  %v329 = vadd.f32 %v217, %v297
  %v330 = vadd.f32 %v218, %v298
  %v331 = vadd.f32 %v219, %v299
  %v332 = vadd.f32 %v220, %v300
  %v333 = vadd.f32 %v221, %v301
  %v334 = vadd.f32 %v222, %v302
  %v335 = vadd.f32 %v223, %v303
  %v336 = vadd.f32 %v224, %v304
  %v337 = vadd.f32 %v225, %v305
  %v338 = vadd.f32 %v226, %v306
  %v339 = vadd.f32 %v227, %v307
  %v340 = vadd.f32 %v228, %v308
  %v341 = vadd.f32 %v229, %v309
  %v342 = vadd.f32 %v230, %v310
  %v343 = vadd.f32 %v231, %v311
  %v344 = vadd.f32 %v232, %v312
  %v345 = vadd.f32 %v233, %v313
  %v346 = vadd.f32 %v234, %v314
  %v347 = vadd.f32 %v235, %v315
  %v348 = vadd.f32 %v236, %v316
  %v349 = vadd.f32 %v237, %v317
  %v350 = vadd.f32 %v238, %v318
  %v351 = vadd.f32 %v239, %v319
  %v352 = vadd.f32 %v240, %v320
  %v353 = vadd.f32 %v241, %v321
  %v354 = vadd.f32 %v242, %v322
  %v355 = vadd.f32 %v243, %v323
  %v356 = vadd.f32 %v244, %v324
  %357 = vset.pattern.permute.xlu0 3
  %358 = vperm.xlu0 %357, %v21
  %v359 = vpop.permute.xlu0 %358
  %361 = vset.pattern.permute.xlu0 3
  %362 = vperm.xlu0 %361, %v22
  %v363 = vpop.permute.xlu0 %362
  %365 = vset.pattern.permute.xlu0 3
  %366 = vperm.xlu0 %365, %v23
  %v367 = vpop.permute.xlu0 %366
  %369 = vset.pattern.permute.xlu0 3
  %370 = vperm.xlu0 %369, %v24
  %v371 = vpop.permute.xlu0 %370
  %v373 = vlaneseq
  %v374 = vshrl.u32 %v373, 7
  %v375 = vsub.s32 3, %v374
  %v376 = vrot.slane %v11, %v375
  %v377 = vlaneseq
  %v378 = vshrl.u32 %v377, 7
  %v379 = vsub.s32 3, %v378
  %v380 = vrot.slane %v12, %v379
  %v381 = vlaneseq
  %v382 = vshrl.u32 %v381, 7
  %v383 = vsub.s32 3, %v382
  %v384 = vrot.slane %v13, %v383
  %v385 = vlaneseq
  %v386 = vshrl.u32 %v385, 7
  %v387 = vsub.s32 3, %v386
  %v388 = vrot.slane %v14, %v387
  %v389 = vlaneseq
  %v390 = vshrl.u32 %v389, 7
  %v391 = vsub.s32 3, %v390
  %v392 = vrot.slane %v15, %v391
  %v393 = vlaneseq
  %v394 = vshrl.u32 %v393, 7
  %v395 = vsub.s32 3, %v394
  %v396 = vrot.slane %v16, %v395
  %v397 = vlaneseq
  %v398 = vshrl.u32 %v397, 7
  %v399 = vsub.s32 3, %v398
  %v400 = vrot.slane %v17, %v399
  %v401 = vlaneseq
  %v402 = vshrl.u32 %v401, 7
  %v403 = vsub.s32 3, %v402
  %v404 = vrot.slane %v18, %v403
  %v405 = vmul.f32 %v359, %v376
  %v406 = vmul.f32 %v359, %v380
  %v407 = vmul.f32 %v359, %v384
  %v408 = vmul.f32 %v359, %v388
  %v409 = vmul.f32 %v359, %v392
  %v410 = vmul.f32 %v359, %v396
  %v411 = vmul.f32 %v359, %v400
  %v412 = vmul.f32 %v359, %v404
  %v413 = vmul.f32 %v363, %v376
  %v414 = vmul.f32 %v363, %v380
  %v415 = vmul.f32 %v363, %v384
  %v416 = vmul.f32 %v363, %v388
  %v417 = vmul.f32 %v363, %v392
  %v418 = vmul.f32 %v363, %v396
  %v419 = vmul.f32 %v363, %v400
  %v420 = vmul.f32 %v363, %v404
  %v421 = vmul.f32 %v367, %v376
  %v422 = vmul.f32 %v367, %v380
  %v423 = vmul.f32 %v367, %v384
  %v424 = vmul.f32 %v367, %v388
  %v425 = vmul.f32 %v367, %v392
  %v426 = vmul.f32 %v367, %v396
  %v427 = vmul.f32 %v367, %v400
  %v428 = vmul.f32 %v367, %v404
  %v429 = vmul.f32 %v371, %v376
  %v430 = vmul.f32 %v371, %v380
  %v431 = vmul.f32 %v371, %v384
  %v432 = vmul.f32 %v371, %v388
  %v433 = vmul.f32 %v371, %v392
  %v434 = vmul.f32 %v371, %v396
  %v435 = vmul.f32 %v371, %v400
  %v436 = vmul.f32 %v371, %v404
  %v437 = vadd.f32 %v325, %v405
  %v438 = vadd.f32 %v326, %v406
  %v439 = vadd.f32 %v327, %v407
  %v440 = vadd.f32 %v328, %v408
  %v441 = vadd.f32 %v329, %v409
  %v442 = vadd.f32 %v330, %v410
  %v443 = vadd.f32 %v331, %v411
  %v444 = vadd.f32 %v332, %v412
  %v445 = vadd.f32 %v333, %v413
  %v446 = vadd.f32 %v334, %v414
  %v447 = vadd.f32 %v335, %v415
  %v448 = vadd.f32 %v336, %v416
  %v449 = vadd.f32 %v337, %v417
  %v450 = vadd.f32 %v338, %v418
  %v451 = vadd.f32 %v339, %v419
  %v452 = vadd.f32 %v340, %v420
  %v453 = vadd.f32 %v341, %v421
  %v454 = vadd.f32 %v342, %v422
  %v455 = vadd.f32 %v343, %v423
  %v456 = vadd.f32 %v344, %v424
  %v457 = vadd.f32 %v345, %v425
  %v458 = vadd.f32 %v346, %v426
  %v459 = vadd.f32 %v347, %v427
  %v460 = vadd.f32 %v348, %v428
  %v461 = vadd.f32 %v349, %v429
  %v462 = vadd.f32 %v350, %v430
  %v463 = vadd.f32 %v351, %v431
  %v464 = vadd.f32 %v352, %v432
  %v465 = vadd.f32 %v353, %v433
  %v466 = vadd.f32 %v354, %v434
  %v467 = vadd.f32 %v355, %v435
  %v468 = vadd.f32 %v356, %v436
  %470 = vset.pattern.permute.xlu0 0
  %471 = vperm.xlu0 %470, %v41
  %v472 = vpop.permute.xlu0 %471
  %475 = vset.pattern.permute.xlu0 0
  %476 = vperm.xlu0 %475, %v42
  %v477 = vpop.permute.xlu0 %476
  %480 = vset.pattern.permute.xlu0 0
  %481 = vperm.xlu0 %480, %v43
  %v482 = vpop.permute.xlu0 %481
  %485 = vset.pattern.permute.xlu0 0
  %486 = vperm.xlu0 %485, %v44
  %v487 = vpop.permute.xlu0 %486
  %v489 = vadd.f32 %v437, %v472
  %v490 = vadd.f32 %v438, %v472
  %v491 = vadd.f32 %v439, %v472
  %v492 = vadd.f32 %v440, %v472
  %v493 = vadd.f32 %v441, %v472
  %v494 = vadd.f32 %v442, %v472
  %v495 = vadd.f32 %v443, %v472
  %v496 = vadd.f32 %v444, %v472
  %v497 = vadd.f32 %v445, %v477
  %v498 = vadd.f32 %v446, %v477
  %v499 = vadd.f32 %v447, %v477
  %v500 = vadd.f32 %v448, %v477
  %v501 = vadd.f32 %v449, %v477
  %v502 = vadd.f32 %v450, %v477
  %v503 = vadd.f32 %v451, %v477
  %v504 = vadd.f32 %v452, %v477
  %v505 = vadd.f32 %v453, %v482
  %v506 = vadd.f32 %v454, %v482
  %v507 = vadd.f32 %v455, %v482
  %v508 = vadd.f32 %v456, %v482
  %v509 = vadd.f32 %v457, %v482
  %v510 = vadd.f32 %v458, %v482
  %v511 = vadd.f32 %v459, %v482
  %v512 = vadd.f32 %v460, %v482
  %v513 = vadd.f32 %v461, %v487
  %v514 = vadd.f32 %v462, %v487
  %v515 = vadd.f32 %v463, %v487
  %v516 = vadd.f32 %v464, %v487
  %v517 = vadd.f32 %v465, %v487
  %v518 = vadd.f32 %v466, %v487
  %v519 = vadd.f32 %v467, %v487
  %v520 = vadd.f32 %v468, %v487
  %v521 = vmax.f32 %v489, 0.0
  %v522 = vmax.f32 %v490, 0.0
  %v523 = vmax.f32 %v491, 0.0
  %v524 = vmax.f32 %v492, 0.0
  %v525 = vmax.f32 %v493, 0.0
  %v526 = vmax.f32 %v494, 0.0
  %v527 = vmax.f32 %v495, 0.0
  %v528 = vmax.f32 %v496, 0.0
  %v529 = vmax.f32 %v497, 0.0
  %v530 = vmax.f32 %v498, 0.0
  %v531 = vmax.f32 %v499, 0.0
  %v532 = vmax.f32 %v500, 0.0
  %v533 = vmax.f32 %v501, 0.0
  %v534 = vmax.f32 %v502, 0.0
  %v535 = vmax.f32 %v503, 0.0
  %v536 = vmax.f32 %v504, 0.0
  %v537 = vmax.f32 %v505, 0.0
  %v538 = vmax.f32 %v506, 0.0
  %v539 = vmax.f32 %v507, 0.0
  %v540 = vmax.f32 %v508, 0.0
  %v541 = vmax.f32 %v509, 0.0
  %v542 = vmax.f32 %v510, 0.0
  %v543 = vmax.f32 %v511, 0.0
  %v544 = vmax.f32 %v512, 0.0
  %v545 = vmax.f32 %v513, 0.0
  %v546 = vmax.f32 %v514, 0.0
  %v547 = vmax.f32 %v515, 0.0
  %v548 = vmax.f32 %v516, 0.0
  %v549 = vmax.f32 %v517, 0.0
  %v550 = vmax.f32 %v518, 0.0
  %v551 = vmax.f32 %v519, 0.0
  %v552 = vmax.f32 %v520, 0.0
  %v553 = vadd.f32 %v521, %v522
  %v554 = vadd.f32 %v553, %v523
  %v555 = vadd.f32 %v554, %v524
  %v556 = vadd.f32 %v555, %v525
  %v557 = vadd.f32 %v556, %v526
  %v558 = vadd.f32 %v557, %v527
  %v559 = vadd.f32 %v558, %v528
  %560 = vadd.xlane.f32.xlu0 %v559
  %v561 = vpop.xlane.xlu0 %560
  %v562 = vadd.f32 %v529, %v530
  %v563 = vadd.f32 %v562, %v531
  %v564 = vadd.f32 %v563, %v532
  %v565 = vadd.f32 %v564, %v533
  %v566 = vadd.f32 %v565, %v534
  %v567 = vadd.f32 %v566, %v535
  %v568 = vadd.f32 %v567, %v536
  %569 = vadd.xlane.f32.xlu0 %v568
  %v570 = vpop.xlane.xlu0 %569
  %v571 = vadd.f32 %v537, %v538
  %v572 = vadd.f32 %v571, %v539
  %v573 = vadd.f32 %v572, %v540
  %v574 = vadd.f32 %v573, %v541
  %v575 = vadd.f32 %v574, %v542
  %v576 = vadd.f32 %v575, %v543
  %v577 = vadd.f32 %v576, %v544
  %578 = vadd.xlane.f32.xlu0 %v577
  %v579 = vpop.xlane.xlu0 %578
  %v580 = vadd.f32 %v545, %v546
  %v581 = vadd.f32 %v580, %v547
  %v582 = vadd.f32 %v581, %v548
  %v583 = vadd.f32 %v582, %v549
  %v584 = vadd.f32 %v583, %v550
  %v585 = vadd.f32 %v584, %v551
  %v586 = vadd.f32 %v585, %v552
  %587 = vadd.xlane.f32.xlu0 %v586
  %v588 = vpop.xlane.xlu0 %587
  %v589 = vmul.f32 %v561, 0.0009765625
  %v590 = vmul.f32 %v570, 0.0009765625
  %v591 = vmul.f32 %v579, 0.0009765625
  %v592 = vmul.f32 %v588, 0.0009765625
  %vm593 = vcmp.eq.s32.totalorder %v46, 0
  %v594 = vsel %vm593, %v589, 0.0
  %v595 = vsel %vm593, %v590, 0.0
  %v596 = vsel %vm593, %v591, 0.0
  %v597 = vsel %vm593, %v592, 0.0
  %v598 = vadd.f32 %v594, 0.0
  %v599 = vadd.f32 %v595, 0.0
  %v600 = vadd.f32 %v596, 0.0
  %v601 = vadd.f32 %v597, 0.0
  %v602 = vlaneseq
  %v603 = vshrl.u32 %v602, 7
  %v604 = vsub.s32 4, %v603
  %v605 = vrot.slane %v11, %v604
  %v606 = vlaneseq
  %v607 = vshrl.u32 %v606, 7
  %v608 = vsub.s32 4, %v607
  %v609 = vrot.slane %v12, %v608
  %v610 = vlaneseq
  %v611 = vshrl.u32 %v610, 7
  %v612 = vsub.s32 4, %v611
  %v613 = vrot.slane %v13, %v612
  %v614 = vlaneseq
  %v615 = vshrl.u32 %v614, 7
  %v616 = vsub.s32 4, %v615
  %v617 = vrot.slane %v14, %v616
  %v618 = vlaneseq
  %v619 = vshrl.u32 %v618, 7
  %v620 = vsub.s32 4, %v619
  %v621 = vrot.slane %v15, %v620
  %v622 = vlaneseq
  %v623 = vshrl.u32 %v622, 7
  %v624 = vsub.s32 4, %v623
  %v625 = vrot.slane %v16, %v624
  %v626 = vlaneseq
  %v627 = vshrl.u32 %v626, 7
  %v628 = vsub.s32 4, %v627
  %v629 = vrot.slane %v17, %v628
  %v630 = vlaneseq
  %v631 = vshrl.u32 %v630, 7
  %v632 = vsub.s32 4, %v631
  %v633 = vrot.slane %v18, %v632
  %v634 = vmul.f32 %v52, %v605
  %v635 = vmul.f32 %v52, %v609
  %v636 = vmul.f32 %v52, %v613
  %v637 = vmul.f32 %v52, %v617
  %v638 = vmul.f32 %v52, %v621
  %v639 = vmul.f32 %v52, %v625
  %v640 = vmul.f32 %v52, %v629
  %v641 = vmul.f32 %v52, %v633
  %v642 = vmul.f32 %v57, %v605
  %v643 = vmul.f32 %v57, %v609
  %v644 = vmul.f32 %v57, %v613
  %v645 = vmul.f32 %v57, %v617
  %v646 = vmul.f32 %v57, %v621
  %v647 = vmul.f32 %v57, %v625
  %v648 = vmul.f32 %v57, %v629
  %v649 = vmul.f32 %v57, %v633
  %v650 = vmul.f32 %v62, %v605
  %v651 = vmul.f32 %v62, %v609
  %v652 = vmul.f32 %v62, %v613
  %v653 = vmul.f32 %v62, %v617
  %v654 = vmul.f32 %v62, %v621
  %v655 = vmul.f32 %v62, %v625
  %v656 = vmul.f32 %v62, %v629
  %v657 = vmul.f32 %v62, %v633
  %v658 = vmul.f32 %v67, %v605
  %v659 = vmul.f32 %v67, %v609
  %v660 = vmul.f32 %v67, %v613
  %v661 = vmul.f32 %v67, %v617
  %v662 = vmul.f32 %v67, %v621
  %v663 = vmul.f32 %v67, %v625
  %v664 = vmul.f32 %v67, %v629
  %v665 = vmul.f32 %v67, %v633
  %v666 = vlaneseq
  %v667 = vshrl.u32 %v666, 7
  %v668 = vsub.s32 5, %v667
  %v669 = vrot.slane %v11, %v668
  %v670 = vlaneseq
  %v671 = vshrl.u32 %v670, 7
  %v672 = vsub.s32 5, %v671
  %v673 = vrot.slane %v12, %v672
  %v674 = vlaneseq
  %v675 = vshrl.u32 %v674, 7
  %v676 = vsub.s32 5, %v675
  %v677 = vrot.slane %v13, %v676
  %v678 = vlaneseq
  %v679 = vshrl.u32 %v678, 7
  %v680 = vsub.s32 5, %v679
  %v681 = vrot.slane %v14, %v680
  %v682 = vlaneseq
  %v683 = vshrl.u32 %v682, 7
  %v684 = vsub.s32 5, %v683
  %v685 = vrot.slane %v15, %v684
  %v686 = vlaneseq
  %v687 = vshrl.u32 %v686, 7
  %v688 = vsub.s32 5, %v687
  %v689 = vrot.slane %v16, %v688
  %v690 = vlaneseq
  %v691 = vshrl.u32 %v690, 7
  %v692 = vsub.s32 5, %v691
  %v693 = vrot.slane %v17, %v692
  %v694 = vlaneseq
  %v695 = vshrl.u32 %v694, 7
  %v696 = vsub.s32 5, %v695
  %v697 = vrot.slane %v18, %v696
  %v698 = vmul.f32 %v135, %v669
  %v699 = vmul.f32 %v135, %v673
  %v700 = vmul.f32 %v135, %v677
  %v701 = vmul.f32 %v135, %v681
  %v702 = vmul.f32 %v135, %v685
  %v703 = vmul.f32 %v135, %v689
  %v704 = vmul.f32 %v135, %v693
  %v705 = vmul.f32 %v135, %v697
  %v706 = vmul.f32 %v139, %v669
  %v707 = vmul.f32 %v139, %v673
  %v708 = vmul.f32 %v139, %v677
  %v709 = vmul.f32 %v139, %v681
  %v710 = vmul.f32 %v139, %v685
  %v711 = vmul.f32 %v139, %v689
  %v712 = vmul.f32 %v139, %v693
  %v713 = vmul.f32 %v139, %v697
  %v714 = vmul.f32 %v143, %v669
  %v715 = vmul.f32 %v143, %v673
  %v716 = vmul.f32 %v143, %v677
  %v717 = vmul.f32 %v143, %v681
  %v718 = vmul.f32 %v143, %v685
  %v719 = vmul.f32 %v143, %v689
  %v720 = vmul.f32 %v143, %v693
  %v721 = vmul.f32 %v143, %v697
  %v722 = vmul.f32 %v147, %v669
  %v723 = vmul.f32 %v147, %v673
  %v724 = vmul.f32 %v147, %v677
  %v725 = vmul.f32 %v147, %v681
  %v726 = vmul.f32 %v147, %v685
  %v727 = vmul.f32 %v147, %v689
  %v728 = vmul.f32 %v147, %v693
  %v729 = vmul.f32 %v147, %v697
  %v730 = vadd.f32 %v634, %v698
  %v731 = vadd.f32 %v635, %v699
  %v732 = vadd.f32 %v636, %v700
  %v733 = vadd.f32 %v637, %v701
  %v734 = vadd.f32 %v638, %v702
  %v735 = vadd.f32 %v639, %v703
  %v736 = vadd.f32 %v640, %v704
  %v737 = vadd.f32 %v641, %v705
  %v738 = vadd.f32 %v642, %v706
  %v739 = vadd.f32 %v643, %v707
  %v740 = vadd.f32 %v644, %v708
  %v741 = vadd.f32 %v645, %v709
  %v742 = vadd.f32 %v646, %v710
  %v743 = vadd.f32 %v647, %v711
  %v744 = vadd.f32 %v648, %v712
  %v745 = vadd.f32 %v649, %v713
  %v746 = vadd.f32 %v650, %v714
  %v747 = vadd.f32 %v651, %v715
  %v748 = vadd.f32 %v652, %v716
  %v749 = vadd.f32 %v653, %v717
  %v750 = vadd.f32 %v654, %v718
  %v751 = vadd.f32 %v655, %v719
  %v752 = vadd.f32 %v656, %v720
  %v753 = vadd.f32 %v657, %v721
  %v754 = vadd.f32 %v658, %v722
  %v755 = vadd.f32 %v659, %v723
  %v756 = vadd.f32 %v660, %v724
  %v757 = vadd.f32 %v661, %v725
  %v758 = vadd.f32 %v662, %v726
  %v759 = vadd.f32 %v663, %v727
  %v760 = vadd.f32 %v664, %v728
  %v761 = vadd.f32 %v665, %v729
  %v762 = vlaneseq
  %v763 = vshrl.u32 %v762, 7
  %v764 = vsub.s32 6, %v763
  %v765 = vrot.slane %v11, %v764
  %v766 = vlaneseq
  %v767 = vshrl.u32 %v766, 7
  %v768 = vsub.s32 6, %v767
  %v769 = vrot.slane %v12, %v768
  %v770 = vlaneseq
  %v771 = vshrl.u32 %v770, 7
  %v772 = vsub.s32 6, %v771
  %v773 = vrot.slane %v13, %v772
  %v774 = vlaneseq
  %v775 = vshrl.u32 %v774, 7
  %v776 = vsub.s32 6, %v775
  %v777 = vrot.slane %v14, %v776
  %v778 = vlaneseq
  %v779 = vshrl.u32 %v778, 7
  %v780 = vsub.s32 6, %v779
  %v781 = vrot.slane %v15, %v780
  %v782 = vlaneseq
  %v783 = vshrl.u32 %v782, 7
  %v784 = vsub.s32 6, %v783
  %v785 = vrot.slane %v16, %v784
  %v786 = vlaneseq
  %v787 = vshrl.u32 %v786, 7
  %v788 = vsub.s32 6, %v787
  %v789 = vrot.slane %v17, %v788
  %v790 = vlaneseq
  %v791 = vshrl.u32 %v790, 7
  %v792 = vsub.s32 6, %v791
  %v793 = vrot.slane %v18, %v792
  %v794 = vmul.f32 %v247, %v765
  %v795 = vmul.f32 %v247, %v769
  %v796 = vmul.f32 %v247, %v773
  %v797 = vmul.f32 %v247, %v777
  %v798 = vmul.f32 %v247, %v781
  %v799 = vmul.f32 %v247, %v785
  %v800 = vmul.f32 %v247, %v789
  %v801 = vmul.f32 %v247, %v793
  %v802 = vmul.f32 %v251, %v765
  %v803 = vmul.f32 %v251, %v769
  %v804 = vmul.f32 %v251, %v773
  %v805 = vmul.f32 %v251, %v777
  %v806 = vmul.f32 %v251, %v781
  %v807 = vmul.f32 %v251, %v785
  %v808 = vmul.f32 %v251, %v789
  %v809 = vmul.f32 %v251, %v793
  %v810 = vmul.f32 %v255, %v765
  %v811 = vmul.f32 %v255, %v769
  %v812 = vmul.f32 %v255, %v773
  %v813 = vmul.f32 %v255, %v777
  %v814 = vmul.f32 %v255, %v781
  %v815 = vmul.f32 %v255, %v785
  %v816 = vmul.f32 %v255, %v789
  %v817 = vmul.f32 %v255, %v793
  %v818 = vmul.f32 %v259, %v765
  %v819 = vmul.f32 %v259, %v769
  %v820 = vmul.f32 %v259, %v773
  %v821 = vmul.f32 %v259, %v777
  %v822 = vmul.f32 %v259, %v781
  %v823 = vmul.f32 %v259, %v785
  %v824 = vmul.f32 %v259, %v789
  %v825 = vmul.f32 %v259, %v793
  %v826 = vadd.f32 %v730, %v794
  %v827 = vadd.f32 %v731, %v795
  %v828 = vadd.f32 %v732, %v796
  %v829 = vadd.f32 %v733, %v797
  %v830 = vadd.f32 %v734, %v798
  %v831 = vadd.f32 %v735, %v799
  %v832 = vadd.f32 %v736, %v800
  %v833 = vadd.f32 %v737, %v801
  %v834 = vadd.f32 %v738, %v802
  %v835 = vadd.f32 %v739, %v803
  %v836 = vadd.f32 %v740, %v804
  %v837 = vadd.f32 %v741, %v805
  %v838 = vadd.f32 %v742, %v806
  %v839 = vadd.f32 %v743, %v807
  %v840 = vadd.f32 %v744, %v808
  %v841 = vadd.f32 %v745, %v809
  %v842 = vadd.f32 %v746, %v810
  %v843 = vadd.f32 %v747, %v811
  %v844 = vadd.f32 %v748, %v812
  %v845 = vadd.f32 %v749, %v813
  %v846 = vadd.f32 %v750, %v814
  %v847 = vadd.f32 %v751, %v815
  %v848 = vadd.f32 %v752, %v816
  %v849 = vadd.f32 %v753, %v817
  %v850 = vadd.f32 %v754, %v818
  %v851 = vadd.f32 %v755, %v819
  %v852 = vadd.f32 %v756, %v820
  %v853 = vadd.f32 %v757, %v821
  %v854 = vadd.f32 %v758, %v822
  %v855 = vadd.f32 %v759, %v823
  %v856 = vadd.f32 %v760, %v824
  %v857 = vadd.f32 %v761, %v825
  %v858 = vlaneseq
  %v859 = vshrl.u32 %v858, 7
  %v860 = vsub.s32 7, %v859
  %v861 = vrot.slane %v11, %v860
  %v862 = vlaneseq
  %v863 = vshrl.u32 %v862, 7
  %v864 = vsub.s32 7, %v863
  %v865 = vrot.slane %v12, %v864
  %v866 = vlaneseq
  %v867 = vshrl.u32 %v866, 7
  %v868 = vsub.s32 7, %v867
  %v869 = vrot.slane %v13, %v868
  %v870 = vlaneseq
  %v871 = vshrl.u32 %v870, 7
  %v872 = vsub.s32 7, %v871
  %v873 = vrot.slane %v14, %v872
  %v874 = vlaneseq
  %v875 = vshrl.u32 %v874, 7
  %v876 = vsub.s32 7, %v875
  %v877 = vrot.slane %v15, %v876
  %v878 = vlaneseq
  %v879 = vshrl.u32 %v878, 7
  %v880 = vsub.s32 7, %v879
  %v881 = vrot.slane %v16, %v880
  %v882 = vlaneseq
  %v883 = vshrl.u32 %v882, 7
  %v884 = vsub.s32 7, %v883
  %v885 = vrot.slane %v17, %v884
  %v886 = vlaneseq
  %v887 = vshrl.u32 %v886, 7
  %v888 = vsub.s32 7, %v887
  %v889 = vrot.slane %v18, %v888
  %v890 = vmul.f32 %v359, %v861
  %v891 = vmul.f32 %v359, %v865
  %v892 = vmul.f32 %v359, %v869
  %v893 = vmul.f32 %v359, %v873
  %v894 = vmul.f32 %v359, %v877
  %v895 = vmul.f32 %v359, %v881
  %v896 = vmul.f32 %v359, %v885
  %v897 = vmul.f32 %v359, %v889
  %v898 = vmul.f32 %v363, %v861
  %v899 = vmul.f32 %v363, %v865
  %v900 = vmul.f32 %v363, %v869
  %v901 = vmul.f32 %v363, %v873
  %v902 = vmul.f32 %v363, %v877
  %v903 = vmul.f32 %v363, %v881
  %v904 = vmul.f32 %v363, %v885
  %v905 = vmul.f32 %v363, %v889
  %v906 = vmul.f32 %v367, %v861
  %v907 = vmul.f32 %v367, %v865
  %v908 = vmul.f32 %v367, %v869
  %v909 = vmul.f32 %v367, %v873
  %v910 = vmul.f32 %v367, %v877
  %v911 = vmul.f32 %v367, %v881
  %v912 = vmul.f32 %v367, %v885
  %v913 = vmul.f32 %v367, %v889
  %v914 = vmul.f32 %v371, %v861
  %v915 = vmul.f32 %v371, %v865
  %v916 = vmul.f32 %v371, %v869
  %v917 = vmul.f32 %v371, %v873
  %v918 = vmul.f32 %v371, %v877
  %v919 = vmul.f32 %v371, %v881
  %v920 = vmul.f32 %v371, %v885
  %v921 = vmul.f32 %v371, %v889
  %v922 = vadd.f32 %v826, %v890
  %v923 = vadd.f32 %v827, %v891
  %v924 = vadd.f32 %v828, %v892
  %v925 = vadd.f32 %v829, %v893
  %v926 = vadd.f32 %v830, %v894
  %v927 = vadd.f32 %v831, %v895
  %v928 = vadd.f32 %v832, %v896
  %v929 = vadd.f32 %v833, %v897
  %v930 = vadd.f32 %v834, %v898
  %v931 = vadd.f32 %v835, %v899
  %v932 = vadd.f32 %v836, %v900
  %v933 = vadd.f32 %v837, %v901
  %v934 = vadd.f32 %v838, %v902
  %v935 = vadd.f32 %v839, %v903
  %v936 = vadd.f32 %v840, %v904
  %v937 = vadd.f32 %v841, %v905
  %v938 = vadd.f32 %v842, %v906
  %v939 = vadd.f32 %v843, %v907
  %v940 = vadd.f32 %v844, %v908
  %v941 = vadd.f32 %v845, %v909
  %v942 = vadd.f32 %v846, %v910
  %v943 = vadd.f32 %v847, %v911
  %v944 = vadd.f32 %v848, %v912
  %v945 = vadd.f32 %v849, %v913
  %v946 = vadd.f32 %v850, %v914
  %v947 = vadd.f32 %v851, %v915
  %v948 = vadd.f32 %v852, %v916
  %v949 = vadd.f32 %v853, %v917
  %v950 = vadd.f32 %v854, %v918
  %v951 = vadd.f32 %v855, %v919
  %v952 = vadd.f32 %v856, %v920
  %v953 = vadd.f32 %v857, %v921
  %v954 = vadd.f32 %v922, %v472
  %v955 = vadd.f32 %v923, %v472
  %v956 = vadd.f32 %v924, %v472
  %v957 = vadd.f32 %v925, %v472
  %v958 = vadd.f32 %v926, %v472
  %v959 = vadd.f32 %v927, %v472
  %v960 = vadd.f32 %v928, %v472
  %v961 = vadd.f32 %v929, %v472
  %v962 = vadd.f32 %v930, %v477
  %v963 = vadd.f32 %v931, %v477
  %v964 = vadd.f32 %v932, %v477
  %v965 = vadd.f32 %v933, %v477
  %v966 = vadd.f32 %v934, %v477
  %v967 = vadd.f32 %v935, %v477
  %v968 = vadd.f32 %v936, %v477
  %v969 = vadd.f32 %v937, %v477
  %v970 = vadd.f32 %v938, %v482
  %v971 = vadd.f32 %v939, %v482
  %v972 = vadd.f32 %v940, %v482
  %v973 = vadd.f32 %v941, %v482
  %v974 = vadd.f32 %v942, %v482
  %v975 = vadd.f32 %v943, %v482
  %v976 = vadd.f32 %v944, %v482
  %v977 = vadd.f32 %v945, %v482
  %v978 = vadd.f32 %v946, %v487
  %v979 = vadd.f32 %v947, %v487
  %v980 = vadd.f32 %v948, %v487
  %v981 = vadd.f32 %v949, %v487
  %v982 = vadd.f32 %v950, %v487
  %v983 = vadd.f32 %v951, %v487
  %v984 = vadd.f32 %v952, %v487
  %v985 = vadd.f32 %v953, %v487
  %v986 = vmax.f32 %v954, 0.0
  %v987 = vmax.f32 %v955, 0.0
  %v988 = vmax.f32 %v956, 0.0
  %v989 = vmax.f32 %v957, 0.0
  %v990 = vmax.f32 %v958, 0.0
  %v991 = vmax.f32 %v959, 0.0
  %v992 = vmax.f32 %v960, 0.0
  %v993 = vmax.f32 %v961, 0.0
  %v994 = vmax.f32 %v962, 0.0
  %v995 = vmax.f32 %v963, 0.0
  %v996 = vmax.f32 %v964, 0.0
  %v997 = vmax.f32 %v965, 0.0
  %v998 = vmax.f32 %v966, 0.0
  %v999 = vmax.f32 %v967, 0.0
  %v1000 = vmax.f32 %v968, 0.0
  %v1001 = vmax.f32 %v969, 0.0
  %v1002 = vmax.f32 %v970, 0.0
  %v1003 = vmax.f32 %v971, 0.0
  %v1004 = vmax.f32 %v972, 0.0
  %v1005 = vmax.f32 %v973, 0.0
  %v1006 = vmax.f32 %v974, 0.0
  %v1007 = vmax.f32 %v975, 0.0
  %v1008 = vmax.f32 %v976, 0.0
  %v1009 = vmax.f32 %v977, 0.0
  %v1010 = vmax.f32 %v978, 0.0
  %v1011 = vmax.f32 %v979, 0.0
  %v1012 = vmax.f32 %v980, 0.0
  %v1013 = vmax.f32 %v981, 0.0
  %v1014 = vmax.f32 %v982, 0.0
  %v1015 = vmax.f32 %v983, 0.0
  %v1016 = vmax.f32 %v984, 0.0
  %v1017 = vmax.f32 %v985, 0.0
  %v1018 = vadd.f32 %v986, %v987
  %v1019 = vadd.f32 %v1018, %v988
  %v1020 = vadd.f32 %v1019, %v989
  %v1021 = vadd.f32 %v1020, %v990
  %v1022 = vadd.f32 %v1021, %v991
  %v1023 = vadd.f32 %v1022, %v992
  %v1024 = vadd.f32 %v1023, %v993
  %1025 = vadd.xlane.f32.xlu0 %v1024
  %v1026 = vpop.xlane.xlu0 %1025
  %v1027 = vadd.f32 %v994, %v995
  %v1028 = vadd.f32 %v1027, %v996
  %v1029 = vadd.f32 %v1028, %v997
  %v1030 = vadd.f32 %v1029, %v998
  %v1031 = vadd.f32 %v1030, %v999
  %v1032 = vadd.f32 %v1031, %v1000
  %v1033 = vadd.f32 %v1032, %v1001
  %1034 = vadd.xlane.f32.xlu0 %v1033
  %v1035 = vpop.xlane.xlu0 %1034
  %v1036 = vadd.f32 %v1002, %v1003
  %v1037 = vadd.f32 %v1036, %v1004
  %v1038 = vadd.f32 %v1037, %v1005
  %v1039 = vadd.f32 %v1038, %v1006
  %v1040 = vadd.f32 %v1039, %v1007
  %v1041 = vadd.f32 %v1040, %v1008
  %v1042 = vadd.f32 %v1041, %v1009
  %1043 = vadd.xlane.f32.xlu0 %v1042
  %v1044 = vpop.xlane.xlu0 %1043
  %v1045 = vadd.f32 %v1010, %v1011
  %v1046 = vadd.f32 %v1045, %v1012
  %v1047 = vadd.f32 %v1046, %v1013
  %v1048 = vadd.f32 %v1047, %v1014
  %v1049 = vadd.f32 %v1048, %v1015
  %v1050 = vadd.f32 %v1049, %v1016
  %v1051 = vadd.f32 %v1050, %v1017
  %1052 = vadd.xlane.f32.xlu0 %v1051
  %v1053 = vpop.xlane.xlu0 %1052
  %v1054 = vmul.f32 %v1026, 0.0009765625
  %v1055 = vmul.f32 %v1035, 0.0009765625
  %v1056 = vmul.f32 %v1044, 0.0009765625
  %v1057 = vmul.f32 %v1053, 0.0009765625
  %vm1058 = vcmp.eq.s32.totalorder %v46, 1
  %v1059 = vsel %vm1058, %v1054, 0.0
  %v1060 = vsel %vm1058, %v1055, 0.0
  %v1061 = vsel %vm1058, %v1056, 0.0
  %v1062 = vsel %vm1058, %v1057, 0.0
  %v1063 = vadd.f32 %v598, %v1059
  %v1064 = vadd.f32 %v599, %v1060
  %v1065 = vadd.f32 %v600, %v1061
  %v1066 = vadd.f32 %v601, %v1062
  %1068 = vset.pattern.permute.xlu0 0
  %1069 = vperm.xlu0 %1068, %v25
  %v1070 = vpop.permute.xlu0 %1069
  %1073 = vset.pattern.permute.xlu0 0
  %1074 = vperm.xlu0 %1073, %v26
  %v1075 = vpop.permute.xlu0 %1074
  %1078 = vset.pattern.permute.xlu0 0
  %1079 = vperm.xlu0 %1078, %v27
  %v1080 = vpop.permute.xlu0 %1079
  %1083 = vset.pattern.permute.xlu0 0
  %1084 = vperm.xlu0 %1083, %v28
  %v1085 = vpop.permute.xlu0 %1084
  %v1087 = vlaneseq
  %v1088 = vshrl.u32 %v1087, 7
  %v1089 = vsub.s32 0, %v1088
  %v1090 = vrot.slane %v19, %v1089
  %v1091 = vlaneseq
  %v1092 = vshrl.u32 %v1091, 7
  %v1093 = vsub.s32 0, %v1092
  %v1094 = vrot.slane %v20, %v1093
  %v1095 = vmul.f32 %v1070, %v1090
  %v1096 = vmul.f32 %v1070, %v1094
  %v1097 = vmul.f32 %v1075, %v1090
  %v1098 = vmul.f32 %v1075, %v1094
  %v1099 = vmul.f32 %v1080, %v1090
  %v1100 = vmul.f32 %v1080, %v1094
  %v1101 = vmul.f32 %v1085, %v1090
  %v1102 = vmul.f32 %v1085, %v1094
  %1103 = vset.pattern.permute.xlu0 1
  %1104 = vperm.xlu0 %1103, %v25
  %v1105 = vpop.permute.xlu0 %1104
  %1107 = vset.pattern.permute.xlu0 1
  %1108 = vperm.xlu0 %1107, %v26
  %v1109 = vpop.permute.xlu0 %1108
  %1111 = vset.pattern.permute.xlu0 1
  %1112 = vperm.xlu0 %1111, %v27
  %v1113 = vpop.permute.xlu0 %1112
  %1115 = vset.pattern.permute.xlu0 1
  %1116 = vperm.xlu0 %1115, %v28
  %v1117 = vpop.permute.xlu0 %1116
  %v1119 = vlaneseq
  %v1120 = vshrl.u32 %v1119, 7
  %v1121 = vsub.s32 1, %v1120
  %v1122 = vrot.slane %v19, %v1121
  %v1123 = vlaneseq
  %v1124 = vshrl.u32 %v1123, 7
  %v1125 = vsub.s32 1, %v1124
  %v1126 = vrot.slane %v20, %v1125
  %v1127 = vmul.f32 %v1105, %v1122
  %v1128 = vmul.f32 %v1105, %v1126
  %v1129 = vmul.f32 %v1109, %v1122
  %v1130 = vmul.f32 %v1109, %v1126
  %v1131 = vmul.f32 %v1113, %v1122
  %v1132 = vmul.f32 %v1113, %v1126
  %v1133 = vmul.f32 %v1117, %v1122
  %v1134 = vmul.f32 %v1117, %v1126
  %v1135 = vadd.f32 %v1095, %v1127
  %v1136 = vadd.f32 %v1096, %v1128
  %v1137 = vadd.f32 %v1097, %v1129
  %v1138 = vadd.f32 %v1098, %v1130
  %v1139 = vadd.f32 %v1099, %v1131
  %v1140 = vadd.f32 %v1100, %v1132
  %v1141 = vadd.f32 %v1101, %v1133
  %v1142 = vadd.f32 %v1102, %v1134
  %1143 = vset.pattern.permute.xlu0 1
  %1144 = vperm.xlu0 %1143, %v41
  %v1145 = vpop.permute.xlu0 %1144
  %1147 = vset.pattern.permute.xlu0 1
  %1148 = vperm.xlu0 %1147, %v42
  %v1149 = vpop.permute.xlu0 %1148
  %1151 = vset.pattern.permute.xlu0 1
  %1152 = vperm.xlu0 %1151, %v43
  %v1153 = vpop.permute.xlu0 %1152
  %1155 = vset.pattern.permute.xlu0 1
  %1156 = vperm.xlu0 %1155, %v44
  %v1157 = vpop.permute.xlu0 %1156
  %v1159 = vadd.f32 %v1135, %v1145
  %v1160 = vadd.f32 %v1136, %v1145
  %v1161 = vadd.f32 %v1137, %v1149
  %v1162 = vadd.f32 %v1138, %v1149
  %v1163 = vadd.f32 %v1139, %v1153
  %v1164 = vadd.f32 %v1140, %v1153
  %v1165 = vadd.f32 %v1141, %v1157
  %v1166 = vadd.f32 %v1142, %v1157
  %v1167 = vmax.f32 %v1159, 0.0
  %v1168 = vmax.f32 %v1160, 0.0
  %v1169 = vmax.f32 %v1161, 0.0
  %v1170 = vmax.f32 %v1162, 0.0
  %v1171 = vmax.f32 %v1163, 0.0
  %v1172 = vmax.f32 %v1164, 0.0
  %v1173 = vmax.f32 %v1165, 0.0
  %v1174 = vmax.f32 %v1166, 0.0
  %v1175 = vadd.f32 %v1167, %v1168
  %1176 = vadd.xlane.f32.xlu0 %v1175
  %v1177 = vpop.xlane.xlu0 %1176
  %v1178 = vadd.f32 %v1169, %v1170
  %1179 = vadd.xlane.f32.xlu0 %v1178
  %v1180 = vpop.xlane.xlu0 %1179
  %v1181 = vadd.f32 %v1171, %v1172
  %1182 = vadd.xlane.f32.xlu0 %v1181
  %v1183 = vpop.xlane.xlu0 %1182
  %v1184 = vadd.f32 %v1173, %v1174
  %1185 = vadd.xlane.f32.xlu0 %v1184
  %v1186 = vpop.xlane.xlu0 %1185
  %v1187 = vmul.f32 %v1177, 0.00390625
  %v1188 = vmul.f32 %v1180, 0.00390625
  %v1189 = vmul.f32 %v1183, 0.00390625
  %v1190 = vmul.f32 %v1186, 0.00390625
  %v1191 = vsel %vm593, %v1187, 0.0
  %v1192 = vsel %vm593, %v1188, 0.0
  %v1193 = vsel %vm593, %v1189, 0.0
  %v1194 = vsel %vm593, %v1190, 0.0
  %v1195 = vadd.f32 %v1191, 0.0
  %v1196 = vadd.f32 %v1192, 0.0
  %v1197 = vadd.f32 %v1193, 0.0
  %v1198 = vadd.f32 %v1194, 0.0
  %v1199 = vlaneseq
  %v1200 = vshrl.u32 %v1199, 7
  %v1201 = vsub.s32 2, %v1200
  %v1202 = vrot.slane %v19, %v1201
  %v1203 = vlaneseq
  %v1204 = vshrl.u32 %v1203, 7
  %v1205 = vsub.s32 2, %v1204
  %v1206 = vrot.slane %v20, %v1205
  %v1207 = vmul.f32 %v1070, %v1202
  %v1208 = vmul.f32 %v1070, %v1206
  %v1209 = vmul.f32 %v1075, %v1202
  %v1210 = vmul.f32 %v1075, %v1206
  %v1211 = vmul.f32 %v1080, %v1202
  %v1212 = vmul.f32 %v1080, %v1206
  %v1213 = vmul.f32 %v1085, %v1202
  %v1214 = vmul.f32 %v1085, %v1206
  %v1215 = vlaneseq
  %v1216 = vshrl.u32 %v1215, 7
  %v1217 = vsub.s32 3, %v1216
  %v1218 = vrot.slane %v19, %v1217
  %v1219 = vlaneseq
  %v1220 = vshrl.u32 %v1219, 7
  %v1221 = vsub.s32 3, %v1220
  %v1222 = vrot.slane %v20, %v1221
  %v1223 = vmul.f32 %v1105, %v1218
  %v1224 = vmul.f32 %v1105, %v1222
  %v1225 = vmul.f32 %v1109, %v1218
  %v1226 = vmul.f32 %v1109, %v1222
  %v1227 = vmul.f32 %v1113, %v1218
  %v1228 = vmul.f32 %v1113, %v1222
  %v1229 = vmul.f32 %v1117, %v1218
  %v1230 = vmul.f32 %v1117, %v1222
  %v1231 = vadd.f32 %v1207, %v1223
  %v1232 = vadd.f32 %v1208, %v1224
  %v1233 = vadd.f32 %v1209, %v1225
  %v1234 = vadd.f32 %v1210, %v1226
  %v1235 = vadd.f32 %v1211, %v1227
  %v1236 = vadd.f32 %v1212, %v1228
  %v1237 = vadd.f32 %v1213, %v1229
  %v1238 = vadd.f32 %v1214, %v1230
  %v1239 = vadd.f32 %v1231, %v1145
  %v1240 = vadd.f32 %v1232, %v1145
  %v1241 = vadd.f32 %v1233, %v1149
  %v1242 = vadd.f32 %v1234, %v1149
  %v1243 = vadd.f32 %v1235, %v1153
  %v1244 = vadd.f32 %v1236, %v1153
  %v1245 = vadd.f32 %v1237, %v1157
  %v1246 = vadd.f32 %v1238, %v1157
  %v1247 = vmax.f32 %v1239, 0.0
  %v1248 = vmax.f32 %v1240, 0.0
  %v1249 = vmax.f32 %v1241, 0.0
  %v1250 = vmax.f32 %v1242, 0.0
  %v1251 = vmax.f32 %v1243, 0.0
  %v1252 = vmax.f32 %v1244, 0.0
  %v1253 = vmax.f32 %v1245, 0.0
  %v1254 = vmax.f32 %v1246, 0.0
  %v1255 = vadd.f32 %v1247, %v1248
  %1256 = vadd.xlane.f32.xlu0 %v1255
  %v1257 = vpop.xlane.xlu0 %1256
  %v1258 = vadd.f32 %v1249, %v1250
  %1259 = vadd.xlane.f32.xlu0 %v1258
  %v1260 = vpop.xlane.xlu0 %1259
  %v1261 = vadd.f32 %v1251, %v1252
  %1262 = vadd.xlane.f32.xlu0 %v1261
  %v1263 = vpop.xlane.xlu0 %1262
  %v1264 = vadd.f32 %v1253, %v1254
  %1265 = vadd.xlane.f32.xlu0 %v1264
  %v1266 = vpop.xlane.xlu0 %1265
  %v1267 = vmul.f32 %v1257, 0.00390625
  %v1268 = vmul.f32 %v1260, 0.00390625
  %v1269 = vmul.f32 %v1263, 0.00390625
  %v1270 = vmul.f32 %v1266, 0.00390625
  %v1271 = vsel %vm1058, %v1267, 0.0
  %v1272 = vsel %vm1058, %v1268, 0.0
  %v1273 = vsel %vm1058, %v1269, 0.0
  %v1274 = vsel %vm1058, %v1270, 0.0
  %v1275 = vadd.f32 %v1195, %v1271
  %v1276 = vadd.f32 %v1196, %v1272
  %v1277 = vadd.f32 %v1197, %v1273
  %v1278 = vadd.f32 %v1198, %v1274
  %1279 = vset.pattern.permute.xlu0 2
  %1280 = vperm.xlu0 %1279, %v41
  %v1281 = vpop.permute.xlu0 %1280
  %1283 = vset.pattern.permute.xlu0 2
  %1284 = vperm.xlu0 %1283, %v42
  %v1285 = vpop.permute.xlu0 %1284
  %1287 = vset.pattern.permute.xlu0 2
  %1288 = vperm.xlu0 %1287, %v43
  %v1289 = vpop.permute.xlu0 %1288
  %1291 = vset.pattern.permute.xlu0 2
  %1292 = vperm.xlu0 %1291, %v44
  %v1293 = vpop.permute.xlu0 %1292
  %vm1295 = vcmask 261120
  %v1297 = vsel %vm1295, %v29, 0
  %v1300 = vsel %vm1295, %v30, 0
  %v1303 = vsel %vm1295, %v31, 0
  %v1306 = vsel %vm1295, %v32, 0
  %1308 = vmatprep.subr.mxu0 0.0
  %1309 = vmatpush1.msra.mxu0 %v1063
  %1310 = vmatprep.subr.mxu0 0.0
  %1311 = vmatpush1.msra.mxu0 %v1064
  %1312 = vmatprep.subr.mxu0 0.0
  %1313 = vmatpush1.msra.mxu0 %v1065
  %1314 = vmatprep.subr.mxu0 0.0
  %1315 = vmatpush1.msra.mxu0 %v1066
  %1316 = vmatprep.subr.mxu0 0.0
  %1317 = vmatpush1.msra.mxu0 0.0
  %1318 = vmatprep.subr.mxu0 0.0
  %1319 = vmatpush1.msra.mxu0 0.0
  %1320 = vmatprep.subr.mxu0 0.0
  %1321 = vmatpush1.msra.mxu0 0.0
  %1322 = vmatprep.subr.mxu0 0.0
  %1323 = vmatpush1.msra.mxu0 0.0
  %1324 = vmatprep.subr.mxu0 0.0
  %1325 = vmatpush1.msra.mxu0 0.0
  %1326 = vmatprep.subr.mxu0 0.0
  %1327 = vmatpush1.msra.mxu0 0.0
  %1328 = vmatprep.subr.mxu0 0.0
  %1329 = vmatpush1.msra.mxu0 0.0
  %1330 = vmatprep.subr.mxu0 0.0
  %1331 = vmatpush1.msra.mxu0 0.0
  %1332 = vmatprep.subr.mxu0 0.0
  %1333 = vmatpush1.msra.mxu0 0.0
  %1334 = vmatprep.subr.mxu0 0.0
  %1335 = vmatpush1.msra.mxu0 0.0
  %1336 = vmatprep.subr.mxu0 0.0
  %1337 = vmatpush1.msra.mxu0 0.0
  %1338 = vmatprep.subr.mxu0 0.0
  %1339 = vmatpush1.msra.mxu0 0.0
  %1340 = vmatprep.subr.mxu0 0.0
  %1341 = vmatpush1.msra.mxu0 0.0
  %1342 = vmatprep.subr.mxu0 0.0
  %1343 = vmatpush1.msra.mxu0 0.0
  %1344 = vmatprep.subr.mxu0 0.0
  %1345 = vmatpush1.msra.mxu0 0.0
  %1346 = vmatprep.subr.mxu0 0.0
  %1347 = vmatpush1.msra.mxu0 0.0
  %1348 = vmatprep.subr.mxu0 0.0
  %1349 = vmatpush1.msra.mxu0 0.0
  %1350 = vmatprep.subr.mxu0 0.0
  %1351 = vmatpush1.msra.mxu0 0.0
  %1352 = vmatprep.subr.mxu0 0.0
  %1353 = vmatpush1.msra.mxu0 0.0
  %1354 = vmatprep.subr.mxu0 0.0
  %1355 = vmatpush1.msra.mxu0 0.0
  %1356 = vmatprep.subr.mxu0 0.0
  %1357 = vmatpush1.msra.mxu0 0.0
  %1358 = vmatprep.subr.mxu0 0.0
  %1359 = vmatpush1.msra.mxu0 0.0
  %1360 = vmatprep.subr.mxu0 0.0
  %1361 = vmatpush1.msra.mxu0 0.0
  %1362 = vmatprep.subr.mxu0 0.0
  %1363 = vmatpush1.msra.mxu0 0.0
  %1364 = vmatprep.subr.mxu0 0.0
  %1365 = vmatpush1.msra.mxu0 0.0
  %1366 = vmatprep.subr.mxu0 0.0
  %1367 = vmatpush1.msra.mxu0 0.0
  %1368 = vmatprep.subr.mxu0 0.0
  %1369 = vmatpush1.msra.mxu0 0.0
  %1370 = vmatprep.subr.mxu0 0.0
  %1371 = vmatpush1.msra.mxu0 0.0
  %1372 = vmatprep.mubr.f32.mxu0 0.0
  %1373 = vmatmul.mubr.f32.gmra.mrb[0].mxu0 %v1297
  %v1374 = vpop.f32.mrb[0].mxu0
  %v1375 = vadd.f32 %v1281, %v1374
  %v1376 = vpop.f32.mrb[0].mxu0
  %1377 = vmatprep.mubr.f32.mxu0 0.0
  %1378 = vmatmul.mubr.f32.gmra.mrb[0].mxu0 %v1300
  %v1379 = vpop.f32.mrb[0].mxu0
  %v1380 = vadd.f32 %v1285, %v1379
  %v1381 = vpop.f32.mrb[0].mxu0
  %1382 = vmatprep.mubr.f32.mxu0 0.0
  %1383 = vmatmul.mubr.f32.gmra.mrb[0].mxu0 %v1303
  %v1384 = vpop.f32.mrb[0].mxu0
  %v1385 = vadd.f32 %v1289, %v1384
  %v1386 = vpop.f32.mrb[0].mxu0
  %1387 = vmatprep.mubr.f32.mxu0 0.0
  %1388 = vmatmul.mubr.f32.gmra.mrb[0].mxu0 %v1306
  %v1389 = vpop.f32.mrb[0].mxu0
  %v1390 = vadd.f32 %v1293, %v1389
  %v1391 = vpop.f32.mrb[0].mxu0
  %1392 = vdwg.mxu0
  %v1393 = vmax.f32 %v1375, 0.0
  %v1394 = vmax.f32 %v1380, 0.0
  %v1395 = vmax.f32 %v1385, 0.0
  %v1396 = vmax.f32 %v1390, 0.0
  %1397 = vset.pattern.permute.xlu0 4
  %1398 = vperm.xlu0 %1397, %v41
  %v1399 = vpop.permute.xlu0 %1398
  %1401 = vset.pattern.permute.xlu0 4
  %1402 = vperm.xlu0 %1401, %v42
  %v1403 = vpop.permute.xlu0 %1402
  %v1406 = vsel %vm1295, %v37, 0
  %v1409 = vsel %vm1295, %v38, 0
  %1411 = vmatprep.subr.mxu0 0.0
  %1412 = vmatpush1.msra.mxu0 %v1393
  %1413 = vmatprep.subr.mxu0 0.0
  %1414 = vmatpush1.msra.mxu0 %v1394
  %1415 = vmatprep.subr.mxu0 0.0
  %1416 = vmatpush1.msra.mxu0 %v1395
  %1417 = vmatprep.subr.mxu0 0.0
  %1418 = vmatpush1.msra.mxu0 %v1396
  %1419 = vmatprep.subr.mxu0 0.0
  %1420 = vmatpush1.msra.mxu0 0.0
  %1421 = vmatprep.subr.mxu0 0.0
  %1422 = vmatpush1.msra.mxu0 0.0
  %1423 = vmatprep.subr.mxu0 0.0
  %1424 = vmatpush1.msra.mxu0 0.0
  %1425 = vmatprep.subr.mxu0 0.0
  %1426 = vmatpush1.msra.mxu0 0.0
  %1427 = vmatprep.subr.mxu0 0.0
  %1428 = vmatpush1.msra.mxu0 0.0
  %1429 = vmatprep.subr.mxu0 0.0
  %1430 = vmatpush1.msra.mxu0 0.0
  %1431 = vmatprep.subr.mxu0 0.0
  %1432 = vmatpush1.msra.mxu0 0.0
  %1433 = vmatprep.subr.mxu0 0.0
  %1434 = vmatpush1.msra.mxu0 0.0
  %1435 = vmatprep.subr.mxu0 0.0
  %1436 = vmatpush1.msra.mxu0 0.0
  %1437 = vmatprep.subr.mxu0 0.0
  %1438 = vmatpush1.msra.mxu0 0.0
  %1439 = vmatprep.subr.mxu0 0.0
  %1440 = vmatpush1.msra.mxu0 0.0
  %1441 = vmatprep.subr.mxu0 0.0
  %1442 = vmatpush1.msra.mxu0 0.0
  %1443 = vmatprep.subr.mxu0 0.0
  %1444 = vmatpush1.msra.mxu0 0.0
  %1445 = vmatprep.subr.mxu0 0.0
  %1446 = vmatpush1.msra.mxu0 0.0
  %1447 = vmatprep.subr.mxu0 0.0
  %1448 = vmatpush1.msra.mxu0 0.0
  %1449 = vmatprep.subr.mxu0 0.0
  %1450 = vmatpush1.msra.mxu0 0.0
  %1451 = vmatprep.subr.mxu0 0.0
  %1452 = vmatpush1.msra.mxu0 0.0
  %1453 = vmatprep.subr.mxu0 0.0
  %1454 = vmatpush1.msra.mxu0 0.0
  %1455 = vmatprep.subr.mxu0 0.0
  %1456 = vmatpush1.msra.mxu0 0.0
  %1457 = vmatprep.subr.mxu0 0.0
  %1458 = vmatpush1.msra.mxu0 0.0
  %1459 = vmatprep.subr.mxu0 0.0
  %1460 = vmatpush1.msra.mxu0 0.0
  %1461 = vmatprep.subr.mxu0 0.0
  %1462 = vmatpush1.msra.mxu0 0.0
  %1463 = vmatprep.subr.mxu0 0.0
  %1464 = vmatpush1.msra.mxu0 0.0
  %1465 = vmatprep.subr.mxu0 0.0
  %1466 = vmatpush1.msra.mxu0 0.0
  %1467 = vmatprep.subr.mxu0 0.0
  %1468 = vmatpush1.msra.mxu0 0.0
  %1469 = vmatprep.subr.mxu0 0.0
  %1470 = vmatpush1.msra.mxu0 0.0
  %1471 = vmatprep.subr.mxu0 0.0
  %1472 = vmatpush1.msra.mxu0 0.0
  %1473 = vmatprep.subr.mxu0 0.0
  %1474 = vmatpush1.msra.mxu0 0.0
  %1475 = vmatprep.mubr.f32.mxu0 0.0
  %1476 = vmatmul.mubr.f32.gmra.mrb[0].mxu0 %v1406
  %v1477 = vpop.f32.mrb[0].mxu0
  %v1478 = vadd.f32 %v1399, %v1477
  %v1479 = vpop.f32.mrb[0].mxu0
  %1480 = vmatprep.mubr.f32.mxu0 0.0
  %1481 = vmatmul.mubr.f32.gmra.mrb[0].mxu0 %v1409
  %v1482 = vpop.f32.mrb[0].mxu0
  %v1483 = vadd.f32 %v1403, %v1482
  %v1484 = vpop.f32.mrb[0].mxu0
  %1485 = vdwg.mxu0
  %v1486 = vmul.f32 %v1478, %v1478
  %v1487 = vmul.f32 %v1483, %v1483
  %vm1488 = vcmask 15360
  %v1489 = vsel %vm1488, %v1486, 0.0
  %v1490 = vsel %vm1488, %v1487, 0.0
  %v1491 = vadd.f32 %v1489, %v1490
  %v1492 = vrot.slane %v1491, 4
  %v1493 = vadd.f32 %v1491, %v1492
  %v1494 = vrot.slane %v1493, 2
  %v1495 = vadd.f32 %v1493, %v1494
  %v1496 = vrot.slane %v1495, 1
  %v1497 = vadd.f32 %v1495, %v1496
  %v1498 = vmax.f32 %v1497, 1e-24
  %v1499 = vrsqrt.pop %v1498
  %v1500 = vmul.f32 %v1478, %v1499
  %v1501 = vmul.f32 %v1483, %v1499
  %1502 = vset.pattern.permute.xlu0 3
  %1503 = vperm.xlu0 %1502, %v41
  %v1504 = vpop.permute.xlu0 %1503
  %1506 = vset.pattern.permute.xlu0 3
  %1507 = vperm.xlu0 %1506, %v42
  %v1508 = vpop.permute.xlu0 %1507
  %1510 = vset.pattern.permute.xlu0 3
  %1511 = vperm.xlu0 %1510, %v43
  %v1512 = vpop.permute.xlu0 %1511
  %1514 = vset.pattern.permute.xlu0 3
  %1515 = vperm.xlu0 %1514, %v44
  %v1516 = vpop.permute.xlu0 %1515
  %v1519 = vsel %vm1295, %v33, 0
  %v1522 = vsel %vm1295, %v34, 0
  %v1525 = vsel %vm1295, %v35, 0
  %v1528 = vsel %vm1295, %v36, 0
  %1530 = vmatprep.subr.mxu0 0.0
  %1531 = vmatpush1.msra.mxu0 %v1275
  %1532 = vmatprep.subr.mxu0 0.0
  %1533 = vmatpush1.msra.mxu0 %v1276
  %1534 = vmatprep.subr.mxu0 0.0
  %1535 = vmatpush1.msra.mxu0 %v1277
  %1536 = vmatprep.subr.mxu0 0.0
  %1537 = vmatpush1.msra.mxu0 %v1278
  %1538 = vmatprep.subr.mxu0 0.0
  %1539 = vmatpush1.msra.mxu0 0.0
  %1540 = vmatprep.subr.mxu0 0.0
  %1541 = vmatpush1.msra.mxu0 0.0
  %1542 = vmatprep.subr.mxu0 0.0
  %1543 = vmatpush1.msra.mxu0 0.0
  %1544 = vmatprep.subr.mxu0 0.0
  %1545 = vmatpush1.msra.mxu0 0.0
  %1546 = vmatprep.subr.mxu0 0.0
  %1547 = vmatpush1.msra.mxu0 0.0
  %1548 = vmatprep.subr.mxu0 0.0
  %1549 = vmatpush1.msra.mxu0 0.0
  %1550 = vmatprep.subr.mxu0 0.0
  %1551 = vmatpush1.msra.mxu0 0.0
  %1552 = vmatprep.subr.mxu0 0.0
  %1553 = vmatpush1.msra.mxu0 0.0
  %1554 = vmatprep.subr.mxu0 0.0
  %1555 = vmatpush1.msra.mxu0 0.0
  %1556 = vmatprep.subr.mxu0 0.0
  %1557 = vmatpush1.msra.mxu0 0.0
  %1558 = vmatprep.subr.mxu0 0.0
  %1559 = vmatpush1.msra.mxu0 0.0
  %1560 = vmatprep.subr.mxu0 0.0
  %1561 = vmatpush1.msra.mxu0 0.0
  %1562 = vmatprep.subr.mxu0 0.0
  %1563 = vmatpush1.msra.mxu0 0.0
  %1564 = vmatprep.subr.mxu0 0.0
  %1565 = vmatpush1.msra.mxu0 0.0
  %1566 = vmatprep.subr.mxu0 0.0
  %1567 = vmatpush1.msra.mxu0 0.0
  %1568 = vmatprep.subr.mxu0 0.0
  %1569 = vmatpush1.msra.mxu0 0.0
  %1570 = vmatprep.subr.mxu0 0.0
  %1571 = vmatpush1.msra.mxu0 0.0
  %1572 = vmatprep.subr.mxu0 0.0
  %1573 = vmatpush1.msra.mxu0 0.0
  %1574 = vmatprep.subr.mxu0 0.0
  %1575 = vmatpush1.msra.mxu0 0.0
  %1576 = vmatprep.subr.mxu0 0.0
  %1577 = vmatpush1.msra.mxu0 0.0
  %1578 = vmatprep.subr.mxu0 0.0
  %1579 = vmatpush1.msra.mxu0 0.0
  %1580 = vmatprep.subr.mxu0 0.0
  %1581 = vmatpush1.msra.mxu0 0.0
  %1582 = vmatprep.subr.mxu0 0.0
  %1583 = vmatpush1.msra.mxu0 0.0
  %1584 = vmatprep.subr.mxu0 0.0
  %1585 = vmatpush1.msra.mxu0 0.0
  %1586 = vmatprep.subr.mxu0 0.0
  %1587 = vmatpush1.msra.mxu0 0.0
  %1588 = vmatprep.subr.mxu0 0.0
  %1589 = vmatpush1.msra.mxu0 0.0
  %1590 = vmatprep.subr.mxu0 0.0
  %1591 = vmatpush1.msra.mxu0 0.0
  %1592 = vmatprep.subr.mxu0 0.0
  %1593 = vmatpush1.msra.mxu0 0.0
  %1594 = vmatprep.mubr.f32.mxu0 0.0
  %1595 = vmatmul.mubr.f32.gmra.mrb[0].mxu0 %v1519
  %v1596 = vpop.f32.mrb[0].mxu0
  %v1597 = vadd.f32 %v1504, %v1596
  %v1598 = vpop.f32.mrb[0].mxu0
  %1599 = vmatprep.mubr.f32.mxu0 0.0
  %1600 = vmatmul.mubr.f32.gmra.mrb[0].mxu0 %v1522
  %v1601 = vpop.f32.mrb[0].mxu0
  %v1602 = vadd.f32 %v1508, %v1601
  %v1603 = vpop.f32.mrb[0].mxu0
  %1604 = vmatprep.mubr.f32.mxu0 0.0
  %1605 = vmatmul.mubr.f32.gmra.mrb[0].mxu0 %v1525
  %v1606 = vpop.f32.mrb[0].mxu0
  %v1607 = vadd.f32 %v1512, %v1606
  %v1608 = vpop.f32.mrb[0].mxu0
  %1609 = vmatprep.mubr.f32.mxu0 0.0
  %1610 = vmatmul.mubr.f32.gmra.mrb[0].mxu0 %v1528
  %v1611 = vpop.f32.mrb[0].mxu0
  %v1612 = vadd.f32 %v1516, %v1611
  %v1613 = vpop.f32.mrb[0].mxu0
  %1614 = vdwg.mxu0
  %v1615 = vmax.f32 %v1597, 0.0
  %v1616 = vmax.f32 %v1602, 0.0
  %v1617 = vmax.f32 %v1607, 0.0
  %v1618 = vmax.f32 %v1612, 0.0
  %1619 = vset.pattern.permute.xlu0 5
  %1620 = vperm.xlu0 %1619, %v41
  %v1621 = vpop.permute.xlu0 %1620
  %1623 = vset.pattern.permute.xlu0 5
  %1624 = vperm.xlu0 %1623, %v42
  %v1625 = vpop.permute.xlu0 %1624
  %v1628 = vsel %vm1295, %v39, 0
  %v1631 = vsel %vm1295, %v40, 0
  %1633 = vmatprep.subr.mxu0 0.0
  %1634 = vmatpush1.msra.mxu0 %v1615
  %1635 = vmatprep.subr.mxu0 0.0
  %1636 = vmatpush1.msra.mxu0 %v1616
  %1637 = vmatprep.subr.mxu0 0.0
  %1638 = vmatpush1.msra.mxu0 %v1617
  %1639 = vmatprep.subr.mxu0 0.0
  %1640 = vmatpush1.msra.mxu0 %v1618
  %1641 = vmatprep.subr.mxu0 0.0
  %1642 = vmatpush1.msra.mxu0 0.0
  %1643 = vmatprep.subr.mxu0 0.0
  %1644 = vmatpush1.msra.mxu0 0.0
  %1645 = vmatprep.subr.mxu0 0.0
  %1646 = vmatpush1.msra.mxu0 0.0
  %1647 = vmatprep.subr.mxu0 0.0
  %1648 = vmatpush1.msra.mxu0 0.0
  %1649 = vmatprep.subr.mxu0 0.0
  %1650 = vmatpush1.msra.mxu0 0.0
  %1651 = vmatprep.subr.mxu0 0.0
  %1652 = vmatpush1.msra.mxu0 0.0
  %1653 = vmatprep.subr.mxu0 0.0
  %1654 = vmatpush1.msra.mxu0 0.0
  %1655 = vmatprep.subr.mxu0 0.0
  %1656 = vmatpush1.msra.mxu0 0.0
  %1657 = vmatprep.subr.mxu0 0.0
  %1658 = vmatpush1.msra.mxu0 0.0
  %1659 = vmatprep.subr.mxu0 0.0
  %1660 = vmatpush1.msra.mxu0 0.0
  %1661 = vmatprep.subr.mxu0 0.0
  %1662 = vmatpush1.msra.mxu0 0.0
  %1663 = vmatprep.subr.mxu0 0.0
  %1664 = vmatpush1.msra.mxu0 0.0
  %1665 = vmatprep.subr.mxu0 0.0
  %1666 = vmatpush1.msra.mxu0 0.0
  %1667 = vmatprep.subr.mxu0 0.0
  %1668 = vmatpush1.msra.mxu0 0.0
  %1669 = vmatprep.subr.mxu0 0.0
  %1670 = vmatpush1.msra.mxu0 0.0
  %1671 = vmatprep.subr.mxu0 0.0
  %1672 = vmatpush1.msra.mxu0 0.0
  %1673 = vmatprep.subr.mxu0 0.0
  %1674 = vmatpush1.msra.mxu0 0.0
  %1675 = vmatprep.subr.mxu0 0.0
  %1676 = vmatpush1.msra.mxu0 0.0
  %1677 = vmatprep.subr.mxu0 0.0
  %1678 = vmatpush1.msra.mxu0 0.0
  %1679 = vmatprep.subr.mxu0 0.0
  %1680 = vmatpush1.msra.mxu0 0.0
  %1681 = vmatprep.subr.mxu0 0.0
  %1682 = vmatpush1.msra.mxu0 0.0
  %1683 = vmatprep.subr.mxu0 0.0
  %1684 = vmatpush1.msra.mxu0 0.0
  %1685 = vmatprep.subr.mxu0 0.0
  %1686 = vmatpush1.msra.mxu0 0.0
  %1687 = vmatprep.subr.mxu0 0.0
  %1688 = vmatpush1.msra.mxu0 0.0
  %1689 = vmatprep.subr.mxu0 0.0
  %1690 = vmatpush1.msra.mxu0 0.0
  %1691 = vmatprep.subr.mxu0 0.0
  %1692 = vmatpush1.msra.mxu0 0.0
  %1693 = vmatprep.subr.mxu0 0.0
  %1694 = vmatpush1.msra.mxu0 0.0
  %1695 = vmatprep.subr.mxu0 0.0
  %1696 = vmatpush1.msra.mxu0 0.0
  %1697 = vmatprep.mubr.f32.mxu0 0.0
  %1698 = vmatmul.mubr.f32.gmra.mrb[0].mxu0 %v1628
  %v1699 = vpop.f32.mrb[0].mxu0
  %v1700 = vadd.f32 %v1621, %v1699
  %v1701 = vpop.f32.mrb[0].mxu0
  %1702 = vmatprep.mubr.f32.mxu0 0.0
  %1703 = vmatmul.mubr.f32.gmra.mrb[0].mxu0 %v1631
  %v1704 = vpop.f32.mrb[0].mxu0
  %v1705 = vadd.f32 %v1625, %v1704
  %v1706 = vpop.f32.mrb[0].mxu0
  %1707 = vdwg.mxu0
  %v1708 = vmul.f32 %v1700, %v1700
  %v1709 = vmul.f32 %v1705, %v1705
  %v1710 = vsel %vm1488, %v1708, 0.0
  %v1711 = vsel %vm1488, %v1709, 0.0
  %v1712 = vadd.f32 %v1710, %v1711
  %v1713 = vrot.slane %v1712, 4
  %v1714 = vadd.f32 %v1712, %v1713
  %v1715 = vrot.slane %v1714, 2
  %v1716 = vadd.f32 %v1714, %v1715
  %v1717 = vrot.slane %v1716, 1
  %v1718 = vadd.f32 %v1716, %v1717
  %v1719 = vmax.f32 %v1718, 1e-24
  %v1720 = vrsqrt.pop %v1719
  %v1721 = vmul.f32 %v1700, %v1720
  %v1722 = vmul.f32 %v1705, %v1720
  %v1723 = vmul.f32 %v1500, 10.0
  %v1724 = vmul.f32 %v1501, 10.0
  %1725 = vxpose.xlu0.b32.start [1/16] %v1723, 128
  %1726 = vxpose.xlu0.b32.cont [2/16] %v1724, 128
  %1727 = vxpose.xlu0.b32.cont [3/16] 0.0, 128
  %1728 = vxpose.xlu0.b32.cont [4/16] 0.0, 128
  %1729 = vxpose.xlu0.b32.cont [5/16] 0.0, 128
  %1730 = vxpose.xlu0.b32.cont [6/16] 0.0, 128
  %1731 = vxpose.xlu0.b32.cont [7/16] 0.0, 128
  %1732 = vxpose.xlu0.b32.cont [8/16] 0.0, 128
  %1733 = vxpose.xlu0.b32.cont [9/16] 0.0, 128
  %1734 = vxpose.xlu0.b32.cont [10/16] 0.0, 128
  %1735 = vxpose.xlu0.b32.cont [11/16] 0.0, 128
  %1736 = vxpose.xlu0.b32.cont [12/16] 0.0, 128
  %1737 = vxpose.xlu0.b32.cont [13/16] 0.0, 128
  %1738 = vxpose.xlu0.b32.cont [14/16] 0.0, 128
  %1739 = vxpose.xlu0.b32.cont [15/16] 0.0, 128
  %1740 = vxpose.xlu0.b32.end [16/16] 0.0, 128
  %v1741 = vpop.trf.xlu0
  %v1742 = vpop.trf.xlu0
  %v1743 = vpop.trf.xlu0
  %v1744 = vpop.trf.xlu0
  %v1745 = vpop.trf.xlu0
  %v1746 = vpop.trf.xlu0
  %v1747 = vpop.trf.xlu0
  %v1748 = vpop.trf.xlu0
  %v1749 = vpop.trf.xlu0
  %v1750 = vpop.trf.xlu0
  %v1751 = vpop.trf.xlu0
  %v1752 = vpop.trf.xlu0
  %v1753 = vpop.trf.xlu0
  %v1754 = vpop.trf.xlu0
  %v1755 = vpop.trf.xlu0
  %v1756 = vpop.trf.xlu0
  %vm1757 = vcmask 130048
  %v1759 = vsel %vm1757, %v1741, 0
  %1761 = vmatprep.subr.mxu0 0.0
  %1762 = vmatpush1.msra.mxu0 %v1721
  %1763 = vmatprep.subr.mxu0 0.0
  %1764 = vmatpush1.msra.mxu0 %v1722
  %1765 = vmatprep.subr.mxu0 0.0
  %1766 = vmatpush1.msra.mxu0 0.0
  %1767 = vmatprep.subr.mxu0 0.0
  %1768 = vmatpush1.msra.mxu0 0.0
  %1769 = vmatprep.subr.mxu0 0.0
  %1770 = vmatpush1.msra.mxu0 0.0
  %1771 = vmatprep.subr.mxu0 0.0
  %1772 = vmatpush1.msra.mxu0 0.0
  %1773 = vmatprep.subr.mxu0 0.0
  %1774 = vmatpush1.msra.mxu0 0.0
  %1775 = vmatprep.subr.mxu0 0.0
  %1776 = vmatpush1.msra.mxu0 0.0
  %1777 = vmatprep.subr.mxu0 0.0
  %1778 = vmatpush1.msra.mxu0 0.0
  %1779 = vmatprep.subr.mxu0 0.0
  %1780 = vmatpush1.msra.mxu0 0.0
  %1781 = vmatprep.subr.mxu0 0.0
  %1782 = vmatpush1.msra.mxu0 0.0
  %1783 = vmatprep.subr.mxu0 0.0
  %1784 = vmatpush1.msra.mxu0 0.0
  %1785 = vmatprep.subr.mxu0 0.0
  %1786 = vmatpush1.msra.mxu0 0.0
  %1787 = vmatprep.subr.mxu0 0.0
  %1788 = vmatpush1.msra.mxu0 0.0
  %1789 = vmatprep.subr.mxu0 0.0
  %1790 = vmatpush1.msra.mxu0 0.0
  %1791 = vmatprep.subr.mxu0 0.0
  %1792 = vmatpush1.msra.mxu0 0.0
  %1793 = vmatprep.subr.mxu0 0.0
  %1794 = vmatpush1.msra.mxu0 0.0
  %1795 = vmatprep.subr.mxu0 0.0
  %1796 = vmatpush1.msra.mxu0 0.0
  %1797 = vmatprep.subr.mxu0 0.0
  %1798 = vmatpush1.msra.mxu0 0.0
  %1799 = vmatprep.subr.mxu0 0.0
  %1800 = vmatpush1.msra.mxu0 0.0
  %1801 = vmatprep.subr.mxu0 0.0
  %1802 = vmatpush1.msra.mxu0 0.0
  %1803 = vmatprep.subr.mxu0 0.0
  %1804 = vmatpush1.msra.mxu0 0.0
  %1805 = vmatprep.subr.mxu0 0.0
  %1806 = vmatpush1.msra.mxu0 0.0
  %1807 = vmatprep.subr.mxu0 0.0
  %1808 = vmatpush1.msra.mxu0 0.0
  %1809 = vmatprep.subr.mxu0 0.0
  %1810 = vmatpush1.msra.mxu0 0.0
  %1811 = vmatprep.subr.mxu0 0.0
  %1812 = vmatpush1.msra.mxu0 0.0
  %1813 = vmatprep.subr.mxu0 0.0
  %1814 = vmatpush1.msra.mxu0 0.0
  %1815 = vmatprep.subr.mxu0 0.0
  %1816 = vmatpush1.msra.mxu0 0.0
  %1817 = vmatprep.subr.mxu0 0.0
  %1818 = vmatpush1.msra.mxu0 0.0
  %1819 = vmatprep.subr.mxu0 0.0
  %1820 = vmatpush1.msra.mxu0 0.0
  %1821 = vmatprep.subr.mxu0 0.0
  %1822 = vmatpush1.msra.mxu0 0.0
  %1823 = vmatprep.subr.mxu0 0.0
  %1824 = vmatpush1.msra.mxu0 0.0
  %1825 = vmatprep.mubr.f32.mxu0 0.0
  %1826 = vmatmul.mubr.f32.gmra.mrb[0].mxu0 %v1759
  %v1827 = vpop.f32.mrb[0].mxu0
  %v1828 = vadd.f32 0.0, %v1827
  %v1829 = vpop.f32.mrb[0].mxu0
  %1830 = vdwg.mxu0
  %vm1831 = vcmp.eq.s32.totalorder %v48, %v46
  %vm1832 = vcmask 9216
  %v1833 = vsel %vm1832, %v1828, -inf
  %1834 = vmax.xlane.f32.xlu0 %v1833
  %v1835 = vpop.xlane.xlu0 %1834
  %v1836 = vrot.slane %v1833, 4
  %v1837 = vmax.f32 %v1833, %v1836
  %v1838 = vrot.slane %v1837, 2
  %v1839 = vmax.f32 %v1837, %v1838
  %v1840 = vrot.slane %v1839, 1
  %v1841 = vmax.f32 %v1839, %v1840
  %v1842 = vsub.f32 %v1828, %v1835
  %v1843 = vmul.f32 %v1842, 1.442695
  %v1844 = vpow.pop %v1843
  %v1845 = vsel %vm1832, %v1844, 0.0
  %1846 = vadd.xlane.f32.xlu0 %v1845
  %v1847 = vpop.xlane.xlu0 %1846
  %v1848 = vlog2.pop %v1847
  %v1849 = vmul.f32 %v1848, 0.6931472
  %v1850 = vadd.f32 %v1835, %v1849
  %v1851 = vsub.f32 %v1828, %v1841
  %v1852 = vmul.f32 %v1851, 1.442695
  %v1853 = vpow.pop %v1852
  %v1854 = vsel %vm1832, %v1853, 0.0
  %v1855 = vrot.slane %v1854, 4
  %v1856 = vadd.f32 %v1854, %v1855
  %v1857 = vrot.slane %v1856, 2
  %v1858 = vadd.f32 %v1856, %v1857
  %v1859 = vrot.slane %v1858, 1
  %v1860 = vadd.f32 %v1858, %v1859
  %v1861 = vlog2.pop %v1860
  %v1862 = vmul.f32 %v1861, 0.6931472
  %v1863 = vadd.f32 %v1841, %v1862
  %v1864 = vsel %vm1831, %v1828, 0.0
  %v1865 = vsel %vm1832, %v1864, 0.0
  %1866 = vadd.xlane.f32.xlu0 %v1865
  %v1867 = vpop.xlane.xlu0 %1866
  %v1868 = vrot.slane %v1865, 4
  %v1869 = vadd.f32 %v1865, %v1868
  %v1870 = vrot.slane %v1869, 2
  %v1871 = vadd.f32 %v1869, %v1870
  %v1872 = vrot.slane %v1871, 1
  %v1873 = vadd.f32 %v1871, %v1872
  %v1874 = vsub.f32 %v1850, %v1867
  %vm1875 = vcmask 1024
  %v1876 = vsel %vm1875, %v1874, 0.0
  %1877 = vadd.xlane.f32.xlu0 %v1876
  %v1878 = vpop.xlane.xlu0 %1877
  %v1879 = vrot.slane %v1878, 4
  %v1880 = vadd.f32 %v1878, %v1879
  %v1881 = vrot.slane %v1880, 2
  %v1882 = vadd.f32 %v1880, %v1881
  %v1883 = vrot.slane %v1882, 1
  %v1884 = vadd.f32 %v1882, %v1883
  %s1885 = vtos %v1884
  %v1886 = vstv %s1885
  %v1887 = vsub.f32 %v1863, %v1873
  %vm1888 = vcmask 8192
  %v1889 = vsel %vm1888, %v1887, 0.0
  %1890 = vadd.xlane.f32.xlu0 %v1889
  %v1891 = vpop.xlane.xlu0 %1890
  %v1892 = vrot.slane %v1891, 4
  %v1893 = vadd.f32 %v1891, %v1892
  %v1894 = vrot.slane %v1893, 2
  %v1895 = vadd.f32 %v1893, %v1894
  %v1896 = vrot.slane %v1895, 1
  %v1897 = vadd.f32 %v1895, %v1896
  %s1898 = vtos %v1897
  %v1899 = vstv %s1898
  %v1900 = vadd.f32 %v1886, %v1899
  %v1901 = vcvt.s32.f32 %v46
  %v1902 = vcvt.s32.f32 %v48
  %vm1903 = vcmp.ge.f32.partialorder %v1828, %v1835
  %v1904 = vsel %vm1903, %v1901, 2.0
  %v1905 = vsel %vm1832, %v1904, inf
  %1906 = vmin.xlane.f32.xlu0 %v1905
  %v1907 = vpop.xlane.xlu0 %1906
  %vm1908 = vcmp.ge.f32.partialorder %v1828, %v1841
  %v1909 = vsel %vm1908, %v1902, 2.0
  %v1910 = vsel %vm1832, %v1909, inf
  %v1911 = vrot.slane %v1910, 4
  %v1912 = vmin.f32 %v1910, %v1911
  %v1913 = vrot.slane %v1912, 2
  %v1914 = vmin.f32 %v1912, %v1913
  %v1915 = vrot.slane %v1914, 1
  %v1916 = vmin.f32 %v1914, %v1915
  %vm1917 = vcmp.eq.f32.partialorder %v1907, %v1902
  %v1918 = vsel %vm1917, 1, 0
  %v1919 = vcvt.s32.f32 %v1918
  %v1920 = vsel %vm1875, %v1919, 0.0
  %1921 = vadd.xlane.f32.xlu0 %v1920
  %v1922 = vpop.xlane.xlu0 %1921
  %v1923 = vrot.slane %v1922, 4
  %v1924 = vadd.f32 %v1922, %v1923
  %v1925 = vrot.slane %v1924, 2
  %v1926 = vadd.f32 %v1924, %v1925
  %v1927 = vrot.slane %v1926, 1
  %v1928 = vadd.f32 %v1926, %v1927
  %s1929 = vtos %v1928
  %v1930 = vstv %s1929
  %vm1931 = vcmp.eq.f32.partialorder %v1916, %v1901
  %v1932 = vsel %vm1931, 1, 0
  %v1933 = vcvt.s32.f32 %v1932
  %v1934 = vsel %vm1888, %v1933, 0.0
  %1935 = vadd.xlane.f32.xlu0 %v1934
  %v1936 = vpop.xlane.xlu0 %1935
  %v1937 = vrot.slane %v1936, 4
  %v1938 = vadd.f32 %v1936, %v1937
  %v1939 = vrot.slane %v1938, 2
  %v1940 = vadd.f32 %v1938, %v1939
  %v1941 = vrot.slane %v1940, 1
  %v1942 = vadd.f32 %v1940, %v1941
  %s1943 = vtos %v1942
  %v1944 = vstv %s1943
  %v1945 = vadd.f32 %v1930, %v1944
  %v1946 = vmul.f32 %v1900, 0.25
  %v1947 = vsel %vm593, %v1946, 0.0
  %v1948 = vmul.f32 %v1945, 0.25
  %v1949 = vmul.f32 %v1948, 100.0
  %v1950 = vsel %vm1058, %v1949, 0.0
  %v1951 = vadd.f32 %v1947, %v1950
  %1952 = vst [vmem:[%s2] sm:$0x1] %v1951
  // Predicated region
  $region10: #{contrast_forward.1} parent=0 // pred_check
    _
  $region11: #{contrast_forward.1} parent=0 // pred_check_branch
    %1954 = sbr.rel (0) target = $region13
  $region12: #{contrast_forward.1} parent=0 // pred_region
    _
  $region13: #{contrast_forward.1} parent=0 // pred_fallthru
    _
  // Predicated region
  $region14: #{contrast_forward.1} parent=0 // pred_check
    _
  $region15: #{contrast_forward.1} parent=0 // pred_check_branch
    %1956 = sbr.rel (0) target = $region17
  $region16: #{contrast_forward.1} parent=0 // pred_region
    _
  $region17: #{contrast_forward.1} parent=0 // pred_fallthru
    _

</llo_original>
